<compile_context>
chip_gen: v5e
topology: v5e:2x2
jax: 0.10.0
libtpu: 0.0.40
codegen_flags: <defaults>
</compile_context>

<pallas_src>
import jax
import jax.numpy as jnp
from jax.experimental import pallas as pl
from jax.experimental.pallas import tpu as pltpu

# ---- module configuration (DilatedInception(c_in=4, c_out=8, kernel_set, d)) ----
KERNEL_SET = [2, 3, 6, 7]            # standard MTGNN kernel set (-> seq_len - 6 for d=1)
DILATION = 1
C_IN = 4
C_OUT_TOTAL = 8                      # must be divisible by len(KERNEL_SET)
CB = C_OUT_TOTAL // len(KERNEL_SET)  # per-branch output channels
K_MAX = max(KERNEL_SET)
SPAN = DILATION * (K_MAX - 1)

assert C_OUT_TOTAL % len(KERNEL_SET) == 0

# ---- tiling constants ----
BM = 128                                   # lane block over M = B*N (compute-bound: 128 is enough,
                                           # maximizes grid steps for megacore / v7x)
SUB = 16                                   # temporal rows per inner step (mult of 16 -> bf16-safe stores)
WIN = ((SUB + SPAN + 7) // 8) * 8          # 8-aligned input window per inner step


def _round_up(x, m):
    return ((x + m - 1) // m) * m


def _tap_plan():
    """Static nonzero structure of the fused zero-padded weights.

    Fused form: out[co, t] = bias[co] + sum_{j,ci} W[j, ci, co] * x[ci, t + j*d].
    Branch of kernel size `kern` only owns offsets j in [K_MAX - kern, K_MAX),
    so taps outside that range are statically zero and are skipped here.
    """
    taps = []
    for j in range(K_MAX):
        hit = tuple(co for co in range(C_OUT_TOTAL)
                    if j >= K_MAX - KERNEL_SET[co // CB])
        if not hit:
            continue
        for ci in range(C_IN):
            taps.append((j, ci, hit))
    return tuple(taps)


_TAPS = _tap_plan()                        # 28 (j, ci) slabs -> 144 nonzero MACs total


def _make_kernel(tblk, n_sub):
    def kernel(x_ref, w_ref, b_ref, o_ref):
        # x_ref: (C_IN, L_pad, BM) f32 VMEM -- full time axis, re-used across t grid steps
        # w_ref: (K_MAX*C_IN*C_OUT,) f32 SMEM -- fused, zero-padded conv weights
        # b_ref: (C_OUT,)           f32 SMEM -- fused bias
        # o_ref: (C_OUT, TBLK, BM)      VMEM
        t_base = pl.program_id(1) * tblk

        @pl.loop(0, n_sub)
        def _(s):
            row0 = pl.multiple_of(s * SUB, SUB)
            t0 = pl.multiple_of(t_base + row0, 8)
            # ONE aligned dynamic window read per sub-step; all tap shifts below
            # are static slices of this value (XLU work, off the VALU path).
            window = x_ref[:, pl.ds(t0, WIN), :]                  # (C_IN, WIN, BM) f32

            accs = [jnp.full((SUB, BM), b_ref[co], jnp.float32)
                    for co in range(C_OUT_TOTAL)]
            for j, ci, hit in _TAPS:
                off = j * DILATION
                xs = window[ci, off:off + SUB, :]                 # static sublane shift
                for co in hit:                                    # statically nonzero taps only
                    w = w_ref[(j * C_IN + ci) * C_OUT_TOTAL + co]  # SMEM scalar operand
                    accs[co] = accs[co] + xs * w

            for co in range(C_OUT_TOTAL):
                o_ref[co, pl.ds(row0, SUB), :] = accs[co].astype(o_ref.dtype)

    return kernel


def dilated_inception(x_nchw, weights, biases, out_dtype=jnp.float32,
                      keep_internal_layout=False):
    """x_nchw: (B, C_IN, N, L) float32. Returns (B, C_OUT_TOTAL, N, L_out).

    out_dtype: dtype of the kernel output (bf16 halves output HBM bytes on v5e).
    keep_internal_layout: if True, return the kernel's (C_OUT, L_out, B*N)
      layout and skip the final transpose (for consumers that chain temporal ops).
    """
    B, C, N, L = x_nchw.shape
    assert C == C_IN
    L_out = L - SPAN
    assert L_out > 0, "sequence too short for the kernel set / dilation"
    M = B * N

    # --- lane-dense relayout: (B,C,N,L) -> (C_IN, L, M); M on lanes, time on sublanes.
    # TODO(synk): this transpose and the inverse one below are plain XLA ops that move
    # the full tensors through HBM; callers chaining temporal convs should use
    # keep_internal_layout=True and feed this layout directly to the next layer.
    x = jnp.transpose(x_nchw, (1, 3, 0, 2)).reshape(C_IN, L, M).astype(jnp.float32)

    # temporal padding: round L_out to SUB, plus room for the aligned read window
    L_out_pad = _round_up(L_out, SUB)
    L_pad = L_out_pad + (WIN - SUB)
    M_pad = _round_up(M, BM)
    x = jnp.pad(x, ((0, 0), (0, L_pad - L), (0, M_pad - M)))

    # temporal grid block = up to 8 SUB-chunks per step (bounded in-kernel loop)
    n_sub_total = L_out_pad // SUB
    n_per = max(d for d in range(1, min(8, n_sub_total) + 1) if n_sub_total % d == 0)
    tblk = n_per * SUB
    grid = (M_pad // BM, L_out_pad // tblk)

    # --- fuse the four branches: zero-padded weights + one bias (flattened for SMEM) ---
    w_fused = jnp.zeros((K_MAX, C_IN, C_OUT_TOTAL), jnp.float32)
    for i, kern in enumerate(KERNEL_SET):
        w_i = jnp.transpose(weights[i][:, :, 0, :], (2, 1, 0)).astype(jnp.float32)
        w_fused = w_fused.at[K_MAX - kern:, :, i * CB:(i + 1) * CB].set(w_i)
    w_flat = w_fused.reshape(-1)                                   # (K_MAX*C_IN*C_OUT,)
    b_flat = jnp.concatenate([b.astype(jnp.float32) for b in biases])  # (C_OUT,)

    # --- VMEM budget: double-buffered x + out blocks; keep <= 48 MiB (v7x has 64 MiB) ---
    out_bytes = jnp.dtype(out_dtype).itemsize
    vmem_need = 2 * (C_IN * L_pad * BM * 4 + C_OUT_TOTAL * tblk * BM * out_bytes) + (2 << 20)
    vmem_limit = int(min(max(vmem_need, 32 * 1024 * 1024), 48 * 1024 * 1024))

    out = pl.pallas_call(
        _make_kernel(tblk, n_per),
        out_shape=jax.ShapeDtypeStruct((C_OUT_TOTAL, L_out_pad, M_pad), out_dtype),
        grid=grid,
        in_specs=[
            pl.BlockSpec((C_IN, L_pad, BM), lambda m, t: (0, 0, m)),
            pl.BlockSpec(memory_space=pltpu.MemorySpace.SMEM),
            pl.BlockSpec(memory_space=pltpu.MemorySpace.SMEM),
        ],
        out_specs=pl.BlockSpec((C_OUT_TOTAL, tblk, BM), lambda m, t: (0, t, m)),
        compiler_params=pltpu.CompilerParams(
            dimension_semantics=("parallel", "parallel"),
            vmem_limit_bytes=vmem_limit),
    )(x, w_flat, b_flat)

    out = out[:, :L_out, :M]
    if keep_internal_layout:
        return out
    out = out.reshape(C_OUT_TOTAL, L_out, B, N)
    return jnp.transpose(out, (2, 0, 3, 1))                        # -> (B, C_OUT, N, L_out)


def dilated_inception_reference(x_nchw, weights, biases):
    """Pure-JAX reference replicating the PyTorch forward exactly."""
    outs = []
    for i, kern in enumerate(KERNEL_SET):
        o = jax.lax.conv_general_dilated(
            x_nchw, weights[i],
            window_strides=(1, 1), padding="VALID",
            rhs_dilation=(1, DILATION),
            dimension_numbers=("NCHW", "OIHW", "NCHW"))
        o = o + biases[i][None, :, None, None]
        outs.append(o)
    L_out = outs[-1].shape[-1]
    outs = [o[..., -L_out:] for o in outs]
    return jnp.concatenate(outs, axis=1)


if __name__ == "__main__":
    key = jax.random.PRNGKey(0)
    B, N, L = 2, 16, 16

    keys = jax.random.split(key, 1 + 2 * len(KERNEL_SET))
    x = jax.random.normal(keys[0], (B, C_IN, N, L), jnp.float32)

    # deterministic parameter init matching _reset_parameters():
    #   weights (dim > 1): xavier_uniform ; biases (dim == 1): uniform_(0, 1)
    weights, biases = [], []
    for i, kern in enumerate(KERNEL_SET):
        fan_in = C_IN * 1 * kern
        fan_out = CB * 1 * kern
        bound = (6.0 / (fan_in + fan_out)) ** 0.5
        w = jax.random.uniform(keys[1 + 2 * i], (CB, C_IN, 1, kern),
                               jnp.float32, minval=-bound, maxval=bound)
        b = jax.random.uniform(keys[2 + 2 * i], (CB,),
                               jnp.float32, minval=0.0, maxval=1.0)
        weights.append(w)
        biases.append(b)

    ref = dilated_inception_reference(x, weights, biases)
    L_out = L - SPAN

    # f32 path (default; recommended on v5e): exact check against the conv reference.
    out = jax.block_until_ready(dilated_inception(x, weights, biases))
    assert out.shape == (B, C_OUT_TOTAL, N, L_out), out.shape
    assert jnp.allclose(out, ref, atol=1e-4, rtol=1e-4), (
        float(jnp.max(jnp.abs(out - ref))))

    # bf16 OUTPUT path (optional HBM saving on v5e): activations/accumulation stay f32.
    out_bf16 = jax.block_until_ready(
        dilated_inception(x, weights, biases, out_dtype=jnp.bfloat16))
    assert out_bf16.shape == (B, C_OUT_TOTAL, N, L_out), out_bf16.shape
    assert jnp.allclose(out_bf16.astype(jnp.float32), ref, atol=5e-2, rtol=5e-2), (
        float(jnp.max(jnp.abs(out_bf16.astype(jnp.float32) - ref))))

    print("KERNEL_OK")
</pallas_src>

<mosaic_0001>
module attributes {stable_mosaic.version = 11 : i64} {
  func.func @kernel(%arg0: i32, %arg1: i32, %arg2: memref<4x24x128xf32, #tpu.memory_space<vmem>>, %arg3: memref<224xf32, #tpu.memory_space<smem>>, %arg4: memref<8xf32, #tpu.memory_space<smem>>, %arg5: memref<8x16x128xf32, #tpu.memory_space<vmem>>) attributes {dimension_semantics = [#tpu.dimension_semantics<parallel>, #tpu.dimension_semantics<parallel>], iteration_bounds = array<i64: 1, 1>, scalar_prefetch = 0 : i64, scratch_operands = 0 : i64, tpu.core_type = #tpu.core_type<tc>, window_params = [{transform_indices = @transform_0, window_bounds = array<i64: 4, 24, 128>}, {transform_indices = @transform_1, window_bounds = array<i64: 224>}, {transform_indices = @transform_2, window_bounds = array<i64: 8>}, {transform_indices = @transform_3, window_bounds = array<i64: 8, 16, 128>}]} {
    %c16_i32 = arith.constant 16 : i32
    %0 = arith.muli %arg1, %c16_i32 : i32
    %c0_i32 = arith.constant 0 : i32
    %c1_i32 = arith.constant 1 : i32
    %1 = arith.muli %c0_i32, %c1_i32 : i32
    %c0_i32_0 = arith.constant 0 : i32
    %2 = arith.addi %c0_i32_0, %1 : i32
    %c16_i32_1 = arith.constant 16 : i32
    %3 = arith.muli %2, %c16_i32_1 : i32
    %4 = tpu.assume_multiple %3, 16 : i32
    %5 = arith.addi %0, %4 : i32
    %6 = tpu.assume_multiple %5, 8 : i32
    %c0 = arith.constant 0 : index
    %7 = arith.index_cast %6 : i32 to index
    %c0_2 = arith.constant 0 : index
    %8 = vector.load %arg2[%c0, %7, %c0_2] : memref<4x24x128xf32, #tpu.memory_space<vmem>>, vector<4x24x128xf32>
    %c0_3 = arith.constant 0 : index
    %9 = memref.load %arg4[%c0_3] : memref<8xf32, #tpu.memory_space<smem>>
    %10 = vector.broadcast %9 : f32 to vector<16x128xf32>
    %c1 = arith.constant 1 : index
    %11 = memref.load %arg4[%c1] : memref<8xf32, #tpu.memory_space<smem>>
    %12 = vector.broadcast %11 : f32 to vector<16x128xf32>
    %c2 = arith.constant 2 : index
    %13 = memref.load %arg4[%c2] : memref<8xf32, #tpu.memory_space<smem>>
    %14 = vector.broadcast %13 : f32 to vector<16x128xf32>
    %c3 = arith.constant 3 : index
    %15 = memref.load %arg4[%c3] : memref<8xf32, #tpu.memory_space<smem>>
    %16 = vector.broadcast %15 : f32 to vector<16x128xf32>
    %c4 = arith.constant 4 : index
    %17 = memref.load %arg4[%c4] : memref<8xf32, #tpu.memory_space<smem>>
    %18 = vector.broadcast %17 : f32 to vector<16x128xf32>
    %c5 = arith.constant 5 : index
    %19 = memref.load %arg4[%c5] : memref<8xf32, #tpu.memory_space<smem>>
    %20 = vector.broadcast %19 : f32 to vector<16x128xf32>
    %c6 = arith.constant 6 : index
    %21 = memref.load %arg4[%c6] : memref<8xf32, #tpu.memory_space<smem>>
    %22 = vector.broadcast %21 : f32 to vector<16x128xf32>
    %c7 = arith.constant 7 : index
    %23 = memref.load %arg4[%c7] : memref<8xf32, #tpu.memory_space<smem>>
    %24 = vector.broadcast %23 : f32 to vector<16x128xf32>
    %25 = vector.extract_strided_slice %8 {offsets = [0, 0, 0], sizes = [1, 16, 128], strides = [1, 1, 1]} : vector<4x24x128xf32> to vector<1x16x128xf32>
    %26 = vector.shape_cast %25 : vector<1x16x128xf32> to vector<16x128xf32>
    %c6_4 = arith.constant 6 : index
    %27 = memref.load %arg3[%c6_4] : memref<224xf32, #tpu.memory_space<smem>>
    %28 = vector.broadcast %27 : f32 to vector<16x128xf32>
    %29 = arith.mulf %26, %28 : vector<16x128xf32>
    %30 = arith.addf %22, %29 : vector<16x128xf32>
    %c7_5 = arith.constant 7 : index
    %31 = memref.load %arg3[%c7_5] : memref<224xf32, #tpu.memory_space<smem>>
    %32 = vector.broadcast %31 : f32 to vector<16x128xf32>
    %33 = arith.mulf %26, %32 : vector<16x128xf32>
    %34 = arith.addf %24, %33 : vector<16x128xf32>
    %35 = vector.extract_strided_slice %8 {offsets = [1, 0, 0], sizes = [1, 16, 128], strides = [1, 1, 1]} : vector<4x24x128xf32> to vector<1x16x128xf32>
    %36 = vector.shape_cast %35 : vector<1x16x128xf32> to vector<16x128xf32>
    %c14 = arith.constant 14 : index
    %37 = memref.load %arg3[%c14] : memref<224xf32, #tpu.memory_space<smem>>
    %38 = vector.broadcast %37 : f32 to vector<16x128xf32>
    %39 = arith.mulf %36, %38 : vector<16x128xf32>
    %40 = arith.addf %30, %39 : vector<16x128xf32>
    %c15 = arith.constant 15 : index
    %41 = memref.load %arg3[%c15] : memref<224xf32, #tpu.memory_space<smem>>
    %42 = vector.broadcast %41 : f32 to vector<16x128xf32>
    %43 = arith.mulf %36, %42 : vector<16x128xf32>
    %44 = arith.addf %34, %43 : vector<16x128xf32>
    %45 = vector.extract_strided_slice %8 {offsets = [2, 0, 0], sizes = [1, 16, 128], strides = [1, 1, 1]} : vector<4x24x128xf32> to vector<1x16x128xf32>
    %46 = vector.shape_cast %45 : vector<1x16x128xf32> to vector<16x128xf32>
    %c22 = arith.constant 22 : index
    %47 = memref.load %arg3[%c22] : memref<224xf32, #tpu.memory_space<smem>>
    %48 = vector.broadcast %47 : f32 to vector<16x128xf32>
    %49 = arith.mulf %46, %48 : vector<16x128xf32>
    %50 = arith.addf %40, %49 : vector<16x128xf32>
    %c23 = arith.constant 23 : index
    %51 = memref.load %arg3[%c23] : memref<224xf32, #tpu.memory_space<smem>>
    %52 = vector.broadcast %51 : f32 to vector<16x128xf32>
    %53 = arith.mulf %46, %52 : vector<16x128xf32>
    %54 = arith.addf %44, %53 : vector<16x128xf32>
    %55 = vector.extract_strided_slice %8 {offsets = [3, 0, 0], sizes = [1, 16, 128], strides = [1, 1, 1]} : vector<4x24x128xf32> to vector<1x16x128xf32>
    %56 = vector.shape_cast %55 : vector<1x16x128xf32> to vector<16x128xf32>
    %c30 = arith.constant 30 : index
    %57 = memref.load %arg3[%c30] : memref<224xf32, #tpu.memory_space<smem>>
    %58 = vector.broadcast %57 : f32 to vector<16x128xf32>
    %59 = arith.mulf %56, %58 : vector<16x128xf32>
    %60 = arith.addf %50, %59 : vector<16x128xf32>
    %c31 = arith.constant 31 : index
    %61 = memref.load %arg3[%c31] : memref<224xf32, #tpu.memory_space<smem>>
    %62 = vector.broadcast %61 : f32 to vector<16x128xf32>
    %63 = arith.mulf %56, %62 : vector<16x128xf32>
    %64 = arith.addf %54, %63 : vector<16x128xf32>
    %65 = vector.extract_strided_slice %8 {offsets = [0, 1, 0], sizes = [1, 16, 128], strides = [1, 1, 1]} : vector<4x24x128xf32> to vector<1x16x128xf32>
    %66 = vector.shape_cast %65 : vector<1x16x128xf32> to vector<16x128xf32>
    %c36 = arith.constant 36 : index
    %67 = memref.load %arg3[%c36] : memref<224xf32, #tpu.memory_space<smem>>
    %68 = vector.broadcast %67 : f32 to vector<16x128xf32>
    %69 = arith.mulf %66, %68 : vector<16x128xf32>
    %70 = arith.addf %18, %69 : vector<16x128xf32>
    %c37 = arith.constant 37 : index
    %71 = memref.load %arg3[%c37] : memref<224xf32, #tpu.memory_space<smem>>
    %72 = vector.broadcast %71 : f32 to vector<16x128xf32>
    %73 = arith.mulf %66, %72 : vector<16x128xf32>
    %74 = arith.addf %20, %73 : vector<16x128xf32>
    %c38 = arith.constant 38 : index
    %75 = memref.load %arg3[%c38] : memref<224xf32, #tpu.memory_space<smem>>
    %76 = vector.broadcast %75 : f32 to vector<16x128xf32>
    %77 = arith.mulf %66, %76 : vector<16x128xf32>
    %78 = arith.addf %60, %77 : vector<16x128xf32>
    %c39 = arith.constant 39 : index
    %79 = memref.load %arg3[%c39] : memref<224xf32, #tpu.memory_space<smem>>
    %80 = vector.broadcast %79 : f32 to vector<16x128xf32>
    %81 = arith.mulf %66, %80 : vector<16x128xf32>
    %82 = arith.addf %64, %81 : vector<16x128xf32>
    %83 = vector.extract_strided_slice %8 {offsets = [1, 1, 0], sizes = [1, 16, 128], strides = [1, 1, 1]} : vector<4x24x128xf32> to vector<1x16x128xf32>
    %84 = vector.shape_cast %83 : vector<1x16x128xf32> to vector<16x128xf32>
    %c44 = arith.constant 44 : index
    %85 = memref.load %arg3[%c44] : memref<224xf32, #tpu.memory_space<smem>>
    %86 = vector.broadcast %85 : f32 to vector<16x128xf32>
    %87 = arith.mulf %84, %86 : vector<16x128xf32>
    %88 = arith.addf %70, %87 : vector<16x128xf32>
    %c45 = arith.constant 45 : index
    %89 = memref.load %arg3[%c45] : memref<224xf32, #tpu.memory_space<smem>>
    %90 = vector.broadcast %89 : f32 to vector<16x128xf32>
    %91 = arith.mulf %84, %90 : vector<16x128xf32>
    %92 = arith.addf %74, %91 : vector<16x128xf32>
    %c46 = arith.constant 46 : index
    %93 = memref.load %arg3[%c46] : memref<224xf32, #tpu.memory_space<smem>>
    %94 = vector.broadcast %93 : f32 to vector<16x128xf32>
    %95 = arith.mulf %84, %94 : vector<16x128xf32>
    %96 = arith.addf %78, %95 : vector<16x128xf32>
    %c47 = arith.constant 47 : index
    %97 = memref.load %arg3[%c47] : memref<224xf32, #tpu.memory_space<smem>>
    %98 = vector.broadcast %97 : f32 to vector<16x128xf32>
    %99 = arith.mulf %84, %98 : vector<16x128xf32>
    %100 = arith.addf %82, %99 : vector<16x128xf32>
    %101 = vector.extract_strided_slice %8 {offsets = [2, 1, 0], sizes = [1, 16, 128], strides = [1, 1, 1]} : vector<4x24x128xf32> to vector<1x16x128xf32>
    %102 = vector.shape_cast %101 : vector<1x16x128xf32> to vector<16x128xf32>
    %c52 = arith.constant 52 : index
    %103 = memref.load %arg3[%c52] : memref<224xf32, #tpu.memory_space<smem>>
    %104 = vector.broadcast %103 : f32 to vector<16x128xf32>
    %105 = arith.mulf %102, %104 : vector<16x128xf32>
    %106 = arith.addf %88, %105 : vector<16x128xf32>
    %c53 = arith.constant 53 : index
    %107 = memref.load %arg3[%c53] : memref<224xf32, #tpu.memory_space<smem>>
    %108 = vector.broadcast %107 : f32 to vector<16x128xf32>
    %109 = arith.mulf %102, %108 : vector<16x128xf32>
    %110 = arith.addf %92, %109 : vector<16x128xf32>
    %c54 = arith.constant 54 : index
    %111 = memref.load %arg3[%c54] : memref<224xf32, #tpu.memory_space<smem>>
    %112 = vector.broadcast %111 : f32 to vector<16x128xf32>
    %113 = arith.mulf %102, %112 : vector<16x128xf32>
    %114 = arith.addf %96, %113 : vector<16x128xf32>
    %c55 = arith.constant 55 : index
    %115 = memref.load %arg3[%c55] : memref<224xf32, #tpu.memory_space<smem>>
    %116 = vector.broadcast %115 : f32 to vector<16x128xf32>
    %117 = arith.mulf %102, %116 : vector<16x128xf32>
    %118 = arith.addf %100, %117 : vector<16x128xf32>
    %119 = vector.extract_strided_slice %8 {offsets = [3, 1, 0], sizes = [1, 16, 128], strides = [1, 1, 1]} : vector<4x24x128xf32> to vector<1x16x128xf32>
    %120 = vector.shape_cast %119 : vector<1x16x128xf32> to vector<16x128xf32>
    %c60 = arith.constant 60 : index
    %121 = memref.load %arg3[%c60] : memref<224xf32, #tpu.memory_space<smem>>
    %122 = vector.broadcast %121 : f32 to vector<16x128xf32>
    %123 = arith.mulf %120, %122 : vector<16x128xf32>
    %124 = arith.addf %106, %123 : vector<16x128xf32>
    %c61 = arith.constant 61 : index
    %125 = memref.load %arg3[%c61] : memref<224xf32, #tpu.memory_space<smem>>
    %126 = vector.broadcast %125 : f32 to vector<16x128xf32>
    %127 = arith.mulf %120, %126 : vector<16x128xf32>
    %128 = arith.addf %110, %127 : vector<16x128xf32>
    %c62 = arith.constant 62 : index
    %129 = memref.load %arg3[%c62] : memref<224xf32, #tpu.memory_space<smem>>
    %130 = vector.broadcast %129 : f32 to vector<16x128xf32>
    %131 = arith.mulf %120, %130 : vector<16x128xf32>
    %132 = arith.addf %114, %131 : vector<16x128xf32>
    %c63 = arith.constant 63 : index
    %133 = memref.load %arg3[%c63] : memref<224xf32, #tpu.memory_space<smem>>
    %134 = vector.broadcast %133 : f32 to vector<16x128xf32>
    %135 = arith.mulf %120, %134 : vector<16x128xf32>
    %136 = arith.addf %118, %135 : vector<16x128xf32>
    %137 = vector.extract_strided_slice %8 {offsets = [0, 2, 0], sizes = [1, 16, 128], strides = [1, 1, 1]} : vector<4x24x128xf32> to vector<1x16x128xf32>
    %138 = vector.shape_cast %137 : vector<1x16x128xf32> to vector<16x128xf32>
    %c68 = arith.constant 68 : index
    %139 = memref.load %arg3[%c68] : memref<224xf32, #tpu.memory_space<smem>>
    %140 = vector.broadcast %139 : f32 to vector<16x128xf32>
    %141 = arith.mulf %138, %140 : vector<16x128xf32>
    %142 = arith.addf %124, %141 : vector<16x128xf32>
    %c69 = arith.constant 69 : index
    %143 = memref.load %arg3[%c69] : memref<224xf32, #tpu.memory_space<smem>>
    %144 = vector.broadcast %143 : f32 to vector<16x128xf32>
    %145 = arith.mulf %138, %144 : vector<16x128xf32>
    %146 = arith.addf %128, %145 : vector<16x128xf32>
    %c70 = arith.constant 70 : index
    %147 = memref.load %arg3[%c70] : memref<224xf32, #tpu.memory_space<smem>>
    %148 = vector.broadcast %147 : f32 to vector<16x128xf32>
    %149 = arith.mulf %138, %148 : vector<16x128xf32>
    %150 = arith.addf %132, %149 : vector<16x128xf32>
    %c71 = arith.constant 71 : index
    %151 = memref.load %arg3[%c71] : memref<224xf32, #tpu.memory_space<smem>>
    %152 = vector.broadcast %151 : f32 to vector<16x128xf32>
    %153 = arith.mulf %138, %152 : vector<16x128xf32>
    %154 = arith.addf %136, %153 : vector<16x128xf32>
    %155 = vector.extract_strided_slice %8 {offsets = [1, 2, 0], sizes = [1, 16, 128], strides = [1, 1, 1]} : vector<4x24x128xf32> to vector<1x16x128xf32>
    %156 = vector.shape_cast %155 : vector<1x16x128xf32> to vector<16x128xf32>
    %c76 = arith.constant 76 : index
    %157 = memref.load %arg3[%c76] : memref<224xf32, #tpu.memory_space<smem>>
    %158 = vector.broadcast %157 : f32 to vector<16x128xf32>
    %159 = arith.mulf %156, %158 : vector<16x128xf32>
    %160 = arith.addf %142, %159 : vector<16x128xf32>
    %c77 = arith.constant 77 : index
    %161 = memref.load %arg3[%c77] : memref<224xf32, #tpu.memory_space<smem>>
    %162 = vector.broadcast %161 : f32 to vector<16x128xf32>
    %163 = arith.mulf %156, %162 : vector<16x128xf32>
    %164 = arith.addf %146, %163 : vector<16x128xf32>
    %c78 = arith.constant 78 : index
    %165 = memref.load %arg3[%c78] : memref<224xf32, #tpu.memory_space<smem>>
    %166 = vector.broadcast %165 : f32 to vector<16x128xf32>
    %167 = arith.mulf %156, %166 : vector<16x128xf32>
    %168 = arith.addf %150, %167 : vector<16x128xf32>
    %c79 = arith.constant 79 : index
    %169 = memref.load %arg3[%c79] : memref<224xf32, #tpu.memory_space<smem>>
    %170 = vector.broadcast %169 : f32 to vector<16x128xf32>
    %171 = arith.mulf %156, %170 : vector<16x128xf32>
    %172 = arith.addf %154, %171 : vector<16x128xf32>
    %173 = vector.extract_strided_slice %8 {offsets = [2, 2, 0], sizes = [1, 16, 128], strides = [1, 1, 1]} : vector<4x24x128xf32> to vector<1x16x128xf32>
    %174 = vector.shape_cast %173 : vector<1x16x128xf32> to vector<16x128xf32>
    %c84 = arith.constant 84 : index
    %175 = memref.load %arg3[%c84] : memref<224xf32, #tpu.memory_space<smem>>
    %176 = vector.broadcast %175 : f32 to vector<16x128xf32>
    %177 = arith.mulf %174, %176 : vector<16x128xf32>
    %178 = arith.addf %160, %177 : vector<16x128xf32>
    %c85 = arith.constant 85 : index
    %179 = memref.load %arg3[%c85] : memref<224xf32, #tpu.memory_space<smem>>
    %180 = vector.broadcast %179 : f32 to vector<16x128xf32>
    %181 = arith.mulf %174, %180 : vector<16x128xf32>
    %182 = arith.addf %164, %181 : vector<16x128xf32>
    %c86 = arith.constant 86 : index
    %183 = memref.load %arg3[%c86] : memref<224xf32, #tpu.memory_space<smem>>
    %184 = vector.broadcast %183 : f32 to vector<16x128xf32>
    %185 = arith.mulf %174, %184 : vector<16x128xf32>
    %186 = arith.addf %168, %185 : vector<16x128xf32>
    %c87 = arith.constant 87 : index
    %187 = memref.load %arg3[%c87] : memref<224xf32, #tpu.memory_space<smem>>
    %188 = vector.broadcast %187 : f32 to vector<16x128xf32>
    %189 = arith.mulf %174, %188 : vector<16x128xf32>
    %190 = arith.addf %172, %189 : vector<16x128xf32>
    %191 = vector.extract_strided_slice %8 {offsets = [3, 2, 0], sizes = [1, 16, 128], strides = [1, 1, 1]} : vector<4x24x128xf32> to vector<1x16x128xf32>
    %192 = vector.shape_cast %191 : vector<1x16x128xf32> to vector<16x128xf32>
    %c92 = arith.constant 92 : index
    %193 = memref.load %arg3[%c92] : memref<224xf32, #tpu.memory_space<smem>>
    %194 = vector.broadcast %193 : f32 to vector<16x128xf32>
    %195 = arith.mulf %192, %194 : vector<16x128xf32>
    %196 = arith.addf %178, %195 : vector<16x128xf32>
    %c93 = arith.constant 93 : index
    %197 = memref.load %arg3[%c93] : memref<224xf32, #tpu.memory_space<smem>>
    %198 = vector.broadcast %197 : f32 to vector<16x128xf32>
    %199 = arith.mulf %192, %198 : vector<16x128xf32>
    %200 = arith.addf %182, %199 : vector<16x128xf32>
    %c94 = arith.constant 94 : index
    %201 = memref.load %arg3[%c94] : memref<224xf32, #tpu.memory_space<smem>>
    %202 = vector.broadcast %201 : f32 to vector<16x128xf32>
    %203 = arith.mulf %192, %202 : vector<16x128xf32>
    %204 = arith.addf %186, %203 : vector<16x128xf32>
    %c95 = arith.constant 95 : index
    %205 = memref.load %arg3[%c95] : memref<224xf32, #tpu.memory_space<smem>>
    %206 = vector.broadcast %205 : f32 to vector<16x128xf32>
    %207 = arith.mulf %192, %206 : vector<16x128xf32>
    %208 = arith.addf %190, %207 : vector<16x128xf32>
    %209 = vector.extract_strided_slice %8 {offsets = [0, 3, 0], sizes = [1, 16, 128], strides = [1, 1, 1]} : vector<4x24x128xf32> to vector<1x16x128xf32>
    %210 = vector.shape_cast %209 : vector<1x16x128xf32> to vector<16x128xf32>
    %c100 = arith.constant 100 : index
    %211 = memref.load %arg3[%c100] : memref<224xf32, #tpu.memory_space<smem>>
    %212 = vector.broadcast %211 : f32 to vector<16x128xf32>
    %213 = arith.mulf %210, %212 : vector<16x128xf32>
    %214 = arith.addf %196, %213 : vector<16x128xf32>
    %c101 = arith.constant 101 : index
    %215 = memref.load %arg3[%c101] : memref<224xf32, #tpu.memory_space<smem>>
    %216 = vector.broadcast %215 : f32 to vector<16x128xf32>
    %217 = arith.mulf %210, %216 : vector<16x128xf32>
    %218 = arith.addf %200, %217 : vector<16x128xf32>
    %c102 = arith.constant 102 : index
    %219 = memref.load %arg3[%c102] : memref<224xf32, #tpu.memory_space<smem>>
    %220 = vector.broadcast %219 : f32 to vector<16x128xf32>
    %221 = arith.mulf %210, %220 : vector<16x128xf32>
    %222 = arith.addf %204, %221 : vector<16x128xf32>
    %c103 = arith.constant 103 : index
    %223 = memref.load %arg3[%c103] : memref<224xf32, #tpu.memory_space<smem>>
    %224 = vector.broadcast %223 : f32 to vector<16x128xf32>
    %225 = arith.mulf %210, %224 : vector<16x128xf32>
    %226 = arith.addf %208, %225 : vector<16x128xf32>
    %227 = vector.extract_strided_slice %8 {offsets = [1, 3, 0], sizes = [1, 16, 128], strides = [1, 1, 1]} : vector<4x24x128xf32> to vector<1x16x128xf32>
    %228 = vector.shape_cast %227 : vector<1x16x128xf32> to vector<16x128xf32>
    %c108 = arith.constant 108 : index
    %229 = memref.load %arg3[%c108] : memref<224xf32, #tpu.memory_space<smem>>
    %230 = vector.broadcast %229 : f32 to vector<16x128xf32>
    %231 = arith.mulf %228, %230 : vector<16x128xf32>
    %232 = arith.addf %214, %231 : vector<16x128xf32>
    %c109 = arith.constant 109 : index
    %233 = memref.load %arg3[%c109] : memref<224xf32, #tpu.memory_space<smem>>
    %234 = vector.broadcast %233 : f32 to vector<16x128xf32>
    %235 = arith.mulf %228, %234 : vector<16x128xf32>
    %236 = arith.addf %218, %235 : vector<16x128xf32>
    %c110 = arith.constant 110 : index
    %237 = memref.load %arg3[%c110] : memref<224xf32, #tpu.memory_space<smem>>
    %238 = vector.broadcast %237 : f32 to vector<16x128xf32>
    %239 = arith.mulf %228, %238 : vector<16x128xf32>
    %240 = arith.addf %222, %239 : vector<16x128xf32>
    %c111 = arith.constant 111 : index
    %241 = memref.load %arg3[%c111] : memref<224xf32, #tpu.memory_space<smem>>
    %242 = vector.broadcast %241 : f32 to vector<16x128xf32>
    %243 = arith.mulf %228, %242 : vector<16x128xf32>
    %244 = arith.addf %226, %243 : vector<16x128xf32>
    %245 = vector.extract_strided_slice %8 {offsets = [2, 3, 0], sizes = [1, 16, 128], strides = [1, 1, 1]} : vector<4x24x128xf32> to vector<1x16x128xf32>
    %246 = vector.shape_cast %245 : vector<1x16x128xf32> to vector<16x128xf32>
    %c116 = arith.constant 116 : index
    %247 = memref.load %arg3[%c116] : memref<224xf32, #tpu.memory_space<smem>>
    %248 = vector.broadcast %247 : f32 to vector<16x128xf32>
    %249 = arith.mulf %246, %248 : vector<16x128xf32>
    %250 = arith.addf %232, %249 : vector<16x128xf32>
    %c117 = arith.constant 117 : index
    %251 = memref.load %arg3[%c117] : memref<224xf32, #tpu.memory_space<smem>>
    %252 = vector.broadcast %251 : f32 to vector<16x128xf32>
    %253 = arith.mulf %246, %252 : vector<16x128xf32>
    %254 = arith.addf %236, %253 : vector<16x128xf32>
    %c118 = arith.constant 118 : index
    %255 = memref.load %arg3[%c118] : memref<224xf32, #tpu.memory_space<smem>>
    %256 = vector.broadcast %255 : f32 to vector<16x128xf32>
    %257 = arith.mulf %246, %256 : vector<16x128xf32>
    %258 = arith.addf %240, %257 : vector<16x128xf32>
    %c119 = arith.constant 119 : index
    %259 = memref.load %arg3[%c119] : memref<224xf32, #tpu.memory_space<smem>>
    %260 = vector.broadcast %259 : f32 to vector<16x128xf32>
    %261 = arith.mulf %246, %260 : vector<16x128xf32>
    %262 = arith.addf %244, %261 : vector<16x128xf32>
    %263 = vector.extract_strided_slice %8 {offsets = [3, 3, 0], sizes = [1, 16, 128], strides = [1, 1, 1]} : vector<4x24x128xf32> to vector<1x16x128xf32>
    %264 = vector.shape_cast %263 : vector<1x16x128xf32> to vector<16x128xf32>
    %c124 = arith.constant 124 : index
    %265 = memref.load %arg3[%c124] : memref<224xf32, #tpu.memory_space<smem>>
    %266 = vector.broadcast %265 : f32 to vector<16x128xf32>
    %267 = arith.mulf %264, %266 : vector<16x128xf32>
    %268 = arith.addf %250, %267 : vector<16x128xf32>
    %c125 = arith.constant 125 : index
    %269 = memref.load %arg3[%c125] : memref<224xf32, #tpu.memory_space<smem>>
    %270 = vector.broadcast %269 : f32 to vector<16x128xf32>
    %271 = arith.mulf %264, %270 : vector<16x128xf32>
    %272 = arith.addf %254, %271 : vector<16x128xf32>
    %c126 = arith.constant 126 : index
    %273 = memref.load %arg3[%c126] : memref<224xf32, #tpu.memory_space<smem>>
    %274 = vector.broadcast %273 : f32 to vector<16x128xf32>
    %275 = arith.mulf %264, %274 : vector<16x128xf32>
    %276 = arith.addf %258, %275 : vector<16x128xf32>
    %c127 = arith.constant 127 : index
    %277 = memref.load %arg3[%c127] : memref<224xf32, #tpu.memory_space<smem>>
    %278 = vector.broadcast %277 : f32 to vector<16x128xf32>
    %279 = arith.mulf %264, %278 : vector<16x128xf32>
    %280 = arith.addf %262, %279 : vector<16x128xf32>
    %281 = vector.extract_strided_slice %8 {offsets = [0, 4, 0], sizes = [1, 16, 128], strides = [1, 1, 1]} : vector<4x24x128xf32> to vector<1x16x128xf32>
    %282 = vector.shape_cast %281 : vector<1x16x128xf32> to vector<16x128xf32>
    %c130 = arith.constant 130 : index
    %283 = memref.load %arg3[%c130] : memref<224xf32, #tpu.memory_space<smem>>
    %284 = vector.broadcast %283 : f32 to vector<16x128xf32>
    %285 = arith.mulf %282, %284 : vector<16x128xf32>
    %286 = arith.addf %14, %285 : vector<16x128xf32>
    %c131 = arith.constant 131 : index
    %287 = memref.load %arg3[%c131] : memref<224xf32, #tpu.memory_space<smem>>
    %288 = vector.broadcast %287 : f32 to vector<16x128xf32>
    %289 = arith.mulf %282, %288 : vector<16x128xf32>
    %290 = arith.addf %16, %289 : vector<16x128xf32>
    %c132 = arith.constant 132 : index
    %291 = memref.load %arg3[%c132] : memref<224xf32, #tpu.memory_space<smem>>
    %292 = vector.broadcast %291 : f32 to vector<16x128xf32>
    %293 = arith.mulf %282, %292 : vector<16x128xf32>
    %294 = arith.addf %268, %293 : vector<16x128xf32>
    %c133 = arith.constant 133 : index
    %295 = memref.load %arg3[%c133] : memref<224xf32, #tpu.memory_space<smem>>
    %296 = vector.broadcast %295 : f32 to vector<16x128xf32>
    %297 = arith.mulf %282, %296 : vector<16x128xf32>
    %298 = arith.addf %272, %297 : vector<16x128xf32>
    %c134 = arith.constant 134 : index
    %299 = memref.load %arg3[%c134] : memref<224xf32, #tpu.memory_space<smem>>
    %300 = vector.broadcast %299 : f32 to vector<16x128xf32>
    %301 = arith.mulf %282, %300 : vector<16x128xf32>
    %302 = arith.addf %276, %301 : vector<16x128xf32>
    %c135 = arith.constant 135 : index
    %303 = memref.load %arg3[%c135] : memref<224xf32, #tpu.memory_space<smem>>
    %304 = vector.broadcast %303 : f32 to vector<16x128xf32>
    %305 = arith.mulf %282, %304 : vector<16x128xf32>
    %306 = arith.addf %280, %305 : vector<16x128xf32>
    %307 = vector.extract_strided_slice %8 {offsets = [1, 4, 0], sizes = [1, 16, 128], strides = [1, 1, 1]} : vector<4x24x128xf32> to vector<1x16x128xf32>
    %308 = vector.shape_cast %307 : vector<1x16x128xf32> to vector<16x128xf32>
    %c138 = arith.constant 138 : index
    %309 = memref.load %arg3[%c138] : memref<224xf32, #tpu.memory_space<smem>>
    %310 = vector.broadcast %309 : f32 to vector<16x128xf32>
    %311 = arith.mulf %308, %310 : vector<16x128xf32>
    %312 = arith.addf %286, %311 : vector<16x128xf32>
    %c139 = arith.constant 139 : index
    %313 = memref.load %arg3[%c139] : memref<224xf32, #tpu.memory_space<smem>>
    %314 = vector.broadcast %313 : f32 to vector<16x128xf32>
    %315 = arith.mulf %308, %314 : vector<16x128xf32>
    %316 = arith.addf %290, %315 : vector<16x128xf32>
    %c140 = arith.constant 140 : index
    %317 = memref.load %arg3[%c140] : memref<224xf32, #tpu.memory_space<smem>>
    %318 = vector.broadcast %317 : f32 to vector<16x128xf32>
    %319 = arith.mulf %308, %318 : vector<16x128xf32>
    %320 = arith.addf %294, %319 : vector<16x128xf32>
    %c141 = arith.constant 141 : index
    %321 = memref.load %arg3[%c141] : memref<224xf32, #tpu.memory_space<smem>>
    %322 = vector.broadcast %321 : f32 to vector<16x128xf32>
    %323 = arith.mulf %308, %322 : vector<16x128xf32>
    %324 = arith.addf %298, %323 : vector<16x128xf32>
    %c142 = arith.constant 142 : index
    %325 = memref.load %arg3[%c142] : memref<224xf32, #tpu.memory_space<smem>>
    %326 = vector.broadcast %325 : f32 to vector<16x128xf32>
    %327 = arith.mulf %308, %326 : vector<16x128xf32>
    %328 = arith.addf %302, %327 : vector<16x128xf32>
    %c143 = arith.constant 143 : index
    %329 = memref.load %arg3[%c143] : memref<224xf32, #tpu.memory_space<smem>>
    %330 = vector.broadcast %329 : f32 to vector<16x128xf32>
    %331 = arith.mulf %308, %330 : vector<16x128xf32>
    %332 = arith.addf %306, %331 : vector<16x128xf32>
    %333 = vector.extract_strided_slice %8 {offsets = [2, 4, 0], sizes = [1, 16, 128], strides = [1, 1, 1]} : vector<4x24x128xf32> to vector<1x16x128xf32>
    %334 = vector.shape_cast %333 : vector<1x16x128xf32> to vector<16x128xf32>
    %c146 = arith.constant 146 : index
    %335 = memref.load %arg3[%c146] : memref<224xf32, #tpu.memory_space<smem>>
    %336 = vector.broadcast %335 : f32 to vector<16x128xf32>
    %337 = arith.mulf %334, %336 : vector<16x128xf32>
    %338 = arith.addf %312, %337 : vector<16x128xf32>
    %c147 = arith.constant 147 : index
    %339 = memref.load %arg3[%c147] : memref<224xf32, #tpu.memory_space<smem>>
    %340 = vector.broadcast %339 : f32 to vector<16x128xf32>
    %341 = arith.mulf %334, %340 : vector<16x128xf32>
    %342 = arith.addf %316, %341 : vector<16x128xf32>
    %c148 = arith.constant 148 : index
    %343 = memref.load %arg3[%c148] : memref<224xf32, #tpu.memory_space<smem>>
    %344 = vector.broadcast %343 : f32 to vector<16x128xf32>
    %345 = arith.mulf %334, %344 : vector<16x128xf32>
    %346 = arith.addf %320, %345 : vector<16x128xf32>
    %c149 = arith.constant 149 : index
    %347 = memref.load %arg3[%c149] : memref<224xf32, #tpu.memory_space<smem>>
    %348 = vector.broadcast %347 : f32 to vector<16x128xf32>
    %349 = arith.mulf %334, %348 : vector<16x128xf32>
    %350 = arith.addf %324, %349 : vector<16x128xf32>
    %c150 = arith.constant 150 : index
    %351 = memref.load %arg3[%c150] : memref<224xf32, #tpu.memory_space<smem>>
    %352 = vector.broadcast %351 : f32 to vector<16x128xf32>
    %353 = arith.mulf %334, %352 : vector<16x128xf32>
    %354 = arith.addf %328, %353 : vector<16x128xf32>
    %c151 = arith.constant 151 : index
    %355 = memref.load %arg3[%c151] : memref<224xf32, #tpu.memory_space<smem>>
    %356 = vector.broadcast %355 : f32 to vector<16x128xf32>
    %357 = arith.mulf %334, %356 : vector<16x128xf32>
    %358 = arith.addf %332, %357 : vector<16x128xf32>
    %359 = vector.extract_strided_slice %8 {offsets = [3, 4, 0], sizes = [1, 16, 128], strides = [1, 1, 1]} : vector<4x24x128xf32> to vector<1x16x128xf32>
    %360 = vector.shape_cast %359 : vector<1x16x128xf32> to vector<16x128xf32>
    %c154 = arith.constant 154 : index
    %361 = memref.load %arg3[%c154] : memref<224xf32, #tpu.memory_space<smem>>
    %362 = vector.broadcast %361 : f32 to vector<16x128xf32>
    %363 = arith.mulf %360, %362 : vector<16x128xf32>
    %364 = arith.addf %338, %363 : vector<16x128xf32>
    %c155 = arith.constant 155 : index
    %365 = memref.load %arg3[%c155] : memref<224xf32, #tpu.memory_space<smem>>
    %366 = vector.broadcast %365 : f32 to vector<16x128xf32>
    %367 = arith.mulf %360, %366 : vector<16x128xf32>
    %368 = arith.addf %342, %367 : vector<16x128xf32>
    %c156 = arith.constant 156 : index
    %369 = memref.load %arg3[%c156] : memref<224xf32, #tpu.memory_space<smem>>
    %370 = vector.broadcast %369 : f32 to vector<16x128xf32>
    %371 = arith.mulf %360, %370 : vector<16x128xf32>
    %372 = arith.addf %346, %371 : vector<16x128xf32>
    %c157 = arith.constant 157 : index
    %373 = memref.load %arg3[%c157] : memref<224xf32, #tpu.memory_space<smem>>
    %374 = vector.broadcast %373 : f32 to vector<16x128xf32>
    %375 = arith.mulf %360, %374 : vector<16x128xf32>
    %376 = arith.addf %350, %375 : vector<16x128xf32>
    %c158 = arith.constant 158 : index
    %377 = memref.load %arg3[%c158] : memref<224xf32, #tpu.memory_space<smem>>
    %378 = vector.broadcast %377 : f32 to vector<16x128xf32>
    %379 = arith.mulf %360, %378 : vector<16x128xf32>
    %380 = arith.addf %354, %379 : vector<16x128xf32>
    %c159 = arith.constant 159 : index
    %381 = memref.load %arg3[%c159] : memref<224xf32, #tpu.memory_space<smem>>
    %382 = vector.broadcast %381 : f32 to vector<16x128xf32>
    %383 = arith.mulf %360, %382 : vector<16x128xf32>
    %384 = arith.addf %358, %383 : vector<16x128xf32>
    %385 = vector.extract_strided_slice %8 {offsets = [0, 5, 0], sizes = [1, 16, 128], strides = [1, 1, 1]} : vector<4x24x128xf32> to vector<1x16x128xf32>
    %386 = vector.shape_cast %385 : vector<1x16x128xf32> to vector<16x128xf32>
    %c160 = arith.constant 160 : index
    %387 = memref.load %arg3[%c160] : memref<224xf32, #tpu.memory_space<smem>>
    %388 = vector.broadcast %387 : f32 to vector<16x128xf32>
    %389 = arith.mulf %386, %388 : vector<16x128xf32>
    %390 = arith.addf %10, %389 : vector<16x128xf32>
    %c161 = arith.constant 161 : index
    %391 = memref.load %arg3[%c161] : memref<224xf32, #tpu.memory_space<smem>>
    %392 = vector.broadcast %391 : f32 to vector<16x128xf32>
    %393 = arith.mulf %386, %392 : vector<16x128xf32>
    %394 = arith.addf %12, %393 : vector<16x128xf32>
    %c162 = arith.constant 162 : index
    %395 = memref.load %arg3[%c162] : memref<224xf32, #tpu.memory_space<smem>>
    %396 = vector.broadcast %395 : f32 to vector<16x128xf32>
    %397 = arith.mulf %386, %396 : vector<16x128xf32>
    %398 = arith.addf %364, %397 : vector<16x128xf32>
    %c163 = arith.constant 163 : index
    %399 = memref.load %arg3[%c163] : memref<224xf32, #tpu.memory_space<smem>>
    %400 = vector.broadcast %399 : f32 to vector<16x128xf32>
    %401 = arith.mulf %386, %400 : vector<16x128xf32>
    %402 = arith.addf %368, %401 : vector<16x128xf32>
    %c164 = arith.constant 164 : index
    %403 = memref.load %arg3[%c164] : memref<224xf32, #tpu.memory_space<smem>>
    %404 = vector.broadcast %403 : f32 to vector<16x128xf32>
    %405 = arith.mulf %386, %404 : vector<16x128xf32>
    %406 = arith.addf %372, %405 : vector<16x128xf32>
    %c165 = arith.constant 165 : index
    %407 = memref.load %arg3[%c165] : memref<224xf32, #tpu.memory_space<smem>>
    %408 = vector.broadcast %407 : f32 to vector<16x128xf32>
    %409 = arith.mulf %386, %408 : vector<16x128xf32>
    %410 = arith.addf %376, %409 : vector<16x128xf32>
    %c166 = arith.constant 166 : index
    %411 = memref.load %arg3[%c166] : memref<224xf32, #tpu.memory_space<smem>>
    %412 = vector.broadcast %411 : f32 to vector<16x128xf32>
    %413 = arith.mulf %386, %412 : vector<16x128xf32>
    %414 = arith.addf %380, %413 : vector<16x128xf32>
    %c167 = arith.constant 167 : index
    %415 = memref.load %arg3[%c167] : memref<224xf32, #tpu.memory_space<smem>>
    %416 = vector.broadcast %415 : f32 to vector<16x128xf32>
    %417 = arith.mulf %386, %416 : vector<16x128xf32>
    %418 = arith.addf %384, %417 : vector<16x128xf32>
    %419 = vector.extract_strided_slice %8 {offsets = [1, 5, 0], sizes = [1, 16, 128], strides = [1, 1, 1]} : vector<4x24x128xf32> to vector<1x16x128xf32>
    %420 = vector.shape_cast %419 : vector<1x16x128xf32> to vector<16x128xf32>
    %c168 = arith.constant 168 : index
    %421 = memref.load %arg3[%c168] : memref<224xf32, #tpu.memory_space<smem>>
    %422 = vector.broadcast %421 : f32 to vector<16x128xf32>
    %423 = arith.mulf %420, %422 : vector<16x128xf32>
    %424 = arith.addf %390, %423 : vector<16x128xf32>
    %c169 = arith.constant 169 : index
    %425 = memref.load %arg3[%c169] : memref<224xf32, #tpu.memory_space<smem>>
    %426 = vector.broadcast %425 : f32 to vector<16x128xf32>
    %427 = arith.mulf %420, %426 : vector<16x128xf32>
    %428 = arith.addf %394, %427 : vector<16x128xf32>
    %c170 = arith.constant 170 : index
    %429 = memref.load %arg3[%c170] : memref<224xf32, #tpu.memory_space<smem>>
    %430 = vector.broadcast %429 : f32 to vector<16x128xf32>
    %431 = arith.mulf %420, %430 : vector<16x128xf32>
    %432 = arith.addf %398, %431 : vector<16x128xf32>
    %c171 = arith.constant 171 : index
    %433 = memref.load %arg3[%c171] : memref<224xf32, #tpu.memory_space<smem>>
    %434 = vector.broadcast %433 : f32 to vector<16x128xf32>
    %435 = arith.mulf %420, %434 : vector<16x128xf32>
    %436 = arith.addf %402, %435 : vector<16x128xf32>
    %c172 = arith.constant 172 : index
    %437 = memref.load %arg3[%c172] : memref<224xf32, #tpu.memory_space<smem>>
    %438 = vector.broadcast %437 : f32 to vector<16x128xf32>
    %439 = arith.mulf %420, %438 : vector<16x128xf32>
    %440 = arith.addf %406, %439 : vector<16x128xf32>
    %c173 = arith.constant 173 : index
    %441 = memref.load %arg3[%c173] : memref<224xf32, #tpu.memory_space<smem>>
    %442 = vector.broadcast %441 : f32 to vector<16x128xf32>
    %443 = arith.mulf %420, %442 : vector<16x128xf32>
    %444 = arith.addf %410, %443 : vector<16x128xf32>
    %c174 = arith.constant 174 : index
    %445 = memref.load %arg3[%c174] : memref<224xf32, #tpu.memory_space<smem>>
    %446 = vector.broadcast %445 : f32 to vector<16x128xf32>
    %447 = arith.mulf %420, %446 : vector<16x128xf32>
    %448 = arith.addf %414, %447 : vector<16x128xf32>
    %c175 = arith.constant 175 : index
    %449 = memref.load %arg3[%c175] : memref<224xf32, #tpu.memory_space<smem>>
    %450 = vector.broadcast %449 : f32 to vector<16x128xf32>
    %451 = arith.mulf %420, %450 : vector<16x128xf32>
    %452 = arith.addf %418, %451 : vector<16x128xf32>
    %453 = vector.extract_strided_slice %8 {offsets = [2, 5, 0], sizes = [1, 16, 128], strides = [1, 1, 1]} : vector<4x24x128xf32> to vector<1x16x128xf32>
    %454 = vector.shape_cast %453 : vector<1x16x128xf32> to vector<16x128xf32>
    %c176 = arith.constant 176 : index
    %455 = memref.load %arg3[%c176] : memref<224xf32, #tpu.memory_space<smem>>
    %456 = vector.broadcast %455 : f32 to vector<16x128xf32>
    %457 = arith.mulf %454, %456 : vector<16x128xf32>
    %458 = arith.addf %424, %457 : vector<16x128xf32>
    %c177 = arith.constant 177 : index
    %459 = memref.load %arg3[%c177] : memref<224xf32, #tpu.memory_space<smem>>
    %460 = vector.broadcast %459 : f32 to vector<16x128xf32>
    %461 = arith.mulf %454, %460 : vector<16x128xf32>
    %462 = arith.addf %428, %461 : vector<16x128xf32>
    %c178 = arith.constant 178 : index
    %463 = memref.load %arg3[%c178] : memref<224xf32, #tpu.memory_space<smem>>
    %464 = vector.broadcast %463 : f32 to vector<16x128xf32>
    %465 = arith.mulf %454, %464 : vector<16x128xf32>
    %466 = arith.addf %432, %465 : vector<16x128xf32>
    %c179 = arith.constant 179 : index
    %467 = memref.load %arg3[%c179] : memref<224xf32, #tpu.memory_space<smem>>
    %468 = vector.broadcast %467 : f32 to vector<16x128xf32>
    %469 = arith.mulf %454, %468 : vector<16x128xf32>
    %470 = arith.addf %436, %469 : vector<16x128xf32>
    %c180 = arith.constant 180 : index
    %471 = memref.load %arg3[%c180] : memref<224xf32, #tpu.memory_space<smem>>
    %472 = vector.broadcast %471 : f32 to vector<16x128xf32>
    %473 = arith.mulf %454, %472 : vector<16x128xf32>
    %474 = arith.addf %440, %473 : vector<16x128xf32>
    %c181 = arith.constant 181 : index
    %475 = memref.load %arg3[%c181] : memref<224xf32, #tpu.memory_space<smem>>
    %476 = vector.broadcast %475 : f32 to vector<16x128xf32>
    %477 = arith.mulf %454, %476 : vector<16x128xf32>
    %478 = arith.addf %444, %477 : vector<16x128xf32>
    %c182 = arith.constant 182 : index
    %479 = memref.load %arg3[%c182] : memref<224xf32, #tpu.memory_space<smem>>
    %480 = vector.broadcast %479 : f32 to vector<16x128xf32>
    %481 = arith.mulf %454, %480 : vector<16x128xf32>
    %482 = arith.addf %448, %481 : vector<16x128xf32>
    %c183 = arith.constant 183 : index
    %483 = memref.load %arg3[%c183] : memref<224xf32, #tpu.memory_space<smem>>
    %484 = vector.broadcast %483 : f32 to vector<16x128xf32>
    %485 = arith.mulf %454, %484 : vector<16x128xf32>
    %486 = arith.addf %452, %485 : vector<16x128xf32>
    %487 = vector.extract_strided_slice %8 {offsets = [3, 5, 0], sizes = [1, 16, 128], strides = [1, 1, 1]} : vector<4x24x128xf32> to vector<1x16x128xf32>
    %488 = vector.shape_cast %487 : vector<1x16x128xf32> to vector<16x128xf32>
    %c184 = arith.constant 184 : index
    %489 = memref.load %arg3[%c184] : memref<224xf32, #tpu.memory_space<smem>>
    %490 = vector.broadcast %489 : f32 to vector<16x128xf32>
    %491 = arith.mulf %488, %490 : vector<16x128xf32>
    %492 = arith.addf %458, %491 : vector<16x128xf32>
    %c185 = arith.constant 185 : index
    %493 = memref.load %arg3[%c185] : memref<224xf32, #tpu.memory_space<smem>>
    %494 = vector.broadcast %493 : f32 to vector<16x128xf32>
    %495 = arith.mulf %488, %494 : vector<16x128xf32>
    %496 = arith.addf %462, %495 : vector<16x128xf32>
    %c186 = arith.constant 186 : index
    %497 = memref.load %arg3[%c186] : memref<224xf32, #tpu.memory_space<smem>>
    %498 = vector.broadcast %497 : f32 to vector<16x128xf32>
    %499 = arith.mulf %488, %498 : vector<16x128xf32>
    %500 = arith.addf %466, %499 : vector<16x128xf32>
    %c187 = arith.constant 187 : index
    %501 = memref.load %arg3[%c187] : memref<224xf32, #tpu.memory_space<smem>>
    %502 = vector.broadcast %501 : f32 to vector<16x128xf32>
    %503 = arith.mulf %488, %502 : vector<16x128xf32>
    %504 = arith.addf %470, %503 : vector<16x128xf32>
    %c188 = arith.constant 188 : index
    %505 = memref.load %arg3[%c188] : memref<224xf32, #tpu.memory_space<smem>>
    %506 = vector.broadcast %505 : f32 to vector<16x128xf32>
    %507 = arith.mulf %488, %506 : vector<16x128xf32>
    %508 = arith.addf %474, %507 : vector<16x128xf32>
    %c189 = arith.constant 189 : index
    %509 = memref.load %arg3[%c189] : memref<224xf32, #tpu.memory_space<smem>>
    %510 = vector.broadcast %509 : f32 to vector<16x128xf32>
    %511 = arith.mulf %488, %510 : vector<16x128xf32>
    %512 = arith.addf %478, %511 : vector<16x128xf32>
    %c190 = arith.constant 190 : index
    %513 = memref.load %arg3[%c190] : memref<224xf32, #tpu.memory_space<smem>>
    %514 = vector.broadcast %513 : f32 to vector<16x128xf32>
    %515 = arith.mulf %488, %514 : vector<16x128xf32>
    %516 = arith.addf %482, %515 : vector<16x128xf32>
    %c191 = arith.constant 191 : index
    %517 = memref.load %arg3[%c191] : memref<224xf32, #tpu.memory_space<smem>>
    %518 = vector.broadcast %517 : f32 to vector<16x128xf32>
    %519 = arith.mulf %488, %518 : vector<16x128xf32>
    %520 = arith.addf %486, %519 : vector<16x128xf32>
    %521 = vector.extract_strided_slice %8 {offsets = [0, 6, 0], sizes = [1, 16, 128], strides = [1, 1, 1]} : vector<4x24x128xf32> to vector<1x16x128xf32>
    %522 = vector.shape_cast %521 : vector<1x16x128xf32> to vector<16x128xf32>
    %c192 = arith.constant 192 : index
    %523 = memref.load %arg3[%c192] : memref<224xf32, #tpu.memory_space<smem>>
    %524 = vector.broadcast %523 : f32 to vector<16x128xf32>
    %525 = arith.mulf %522, %524 : vector<16x128xf32>
    %526 = arith.addf %492, %525 : vector<16x128xf32>
    %c193 = arith.constant 193 : index
    %527 = memref.load %arg3[%c193] : memref<224xf32, #tpu.memory_space<smem>>
    %528 = vector.broadcast %527 : f32 to vector<16x128xf32>
    %529 = arith.mulf %522, %528 : vector<16x128xf32>
    %530 = arith.addf %496, %529 : vector<16x128xf32>
    %c194 = arith.constant 194 : index
    %531 = memref.load %arg3[%c194] : memref<224xf32, #tpu.memory_space<smem>>
    %532 = vector.broadcast %531 : f32 to vector<16x128xf32>
    %533 = arith.mulf %522, %532 : vector<16x128xf32>
    %534 = arith.addf %500, %533 : vector<16x128xf32>
    %c195 = arith.constant 195 : index
    %535 = memref.load %arg3[%c195] : memref<224xf32, #tpu.memory_space<smem>>
    %536 = vector.broadcast %535 : f32 to vector<16x128xf32>
    %537 = arith.mulf %522, %536 : vector<16x128xf32>
    %538 = arith.addf %504, %537 : vector<16x128xf32>
    %c196 = arith.constant 196 : index
    %539 = memref.load %arg3[%c196] : memref<224xf32, #tpu.memory_space<smem>>
    %540 = vector.broadcast %539 : f32 to vector<16x128xf32>
    %541 = arith.mulf %522, %540 : vector<16x128xf32>
    %542 = arith.addf %508, %541 : vector<16x128xf32>
    %c197 = arith.constant 197 : index
    %543 = memref.load %arg3[%c197] : memref<224xf32, #tpu.memory_space<smem>>
    %544 = vector.broadcast %543 : f32 to vector<16x128xf32>
    %545 = arith.mulf %522, %544 : vector<16x128xf32>
    %546 = arith.addf %512, %545 : vector<16x128xf32>
    %c198 = arith.constant 198 : index
    %547 = memref.load %arg3[%c198] : memref<224xf32, #tpu.memory_space<smem>>
    %548 = vector.broadcast %547 : f32 to vector<16x128xf32>
    %549 = arith.mulf %522, %548 : vector<16x128xf32>
    %550 = arith.addf %516, %549 : vector<16x128xf32>
    %c199 = arith.constant 199 : index
    %551 = memref.load %arg3[%c199] : memref<224xf32, #tpu.memory_space<smem>>
    %552 = vector.broadcast %551 : f32 to vector<16x128xf32>
    %553 = arith.mulf %522, %552 : vector<16x128xf32>
    %554 = arith.addf %520, %553 : vector<16x128xf32>
    %555 = vector.extract_strided_slice %8 {offsets = [1, 6, 0], sizes = [1, 16, 128], strides = [1, 1, 1]} : vector<4x24x128xf32> to vector<1x16x128xf32>
    %556 = vector.shape_cast %555 : vector<1x16x128xf32> to vector<16x128xf32>
    %c200 = arith.constant 200 : index
    %557 = memref.load %arg3[%c200] : memref<224xf32, #tpu.memory_space<smem>>
    %558 = vector.broadcast %557 : f32 to vector<16x128xf32>
    %559 = arith.mulf %556, %558 : vector<16x128xf32>
    %560 = arith.addf %526, %559 : vector<16x128xf32>
    %c201 = arith.constant 201 : index
    %561 = memref.load %arg3[%c201] : memref<224xf32, #tpu.memory_space<smem>>
    %562 = vector.broadcast %561 : f32 to vector<16x128xf32>
    %563 = arith.mulf %556, %562 : vector<16x128xf32>
    %564 = arith.addf %530, %563 : vector<16x128xf32>
    %c202 = arith.constant 202 : index
    %565 = memref.load %arg3[%c202] : memref<224xf32, #tpu.memory_space<smem>>
    %566 = vector.broadcast %565 : f32 to vector<16x128xf32>
    %567 = arith.mulf %556, %566 : vector<16x128xf32>
    %568 = arith.addf %534, %567 : vector<16x128xf32>
    %c203 = arith.constant 203 : index
    %569 = memref.load %arg3[%c203] : memref<224xf32, #tpu.memory_space<smem>>
    %570 = vector.broadcast %569 : f32 to vector<16x128xf32>
    %571 = arith.mulf %556, %570 : vector<16x128xf32>
    %572 = arith.addf %538, %571 : vector<16x128xf32>
    %c204 = arith.constant 204 : index
    %573 = memref.load %arg3[%c204] : memref<224xf32, #tpu.memory_space<smem>>
    %574 = vector.broadcast %573 : f32 to vector<16x128xf32>
    %575 = arith.mulf %556, %574 : vector<16x128xf32>
    %576 = arith.addf %542, %575 : vector<16x128xf32>
    %c205 = arith.constant 205 : index
    %577 = memref.load %arg3[%c205] : memref<224xf32, #tpu.memory_space<smem>>
    %578 = vector.broadcast %577 : f32 to vector<16x128xf32>
    %579 = arith.mulf %556, %578 : vector<16x128xf32>
    %580 = arith.addf %546, %579 : vector<16x128xf32>
    %c206 = arith.constant 206 : index
    %581 = memref.load %arg3[%c206] : memref<224xf32, #tpu.memory_space<smem>>
    %582 = vector.broadcast %581 : f32 to vector<16x128xf32>
    %583 = arith.mulf %556, %582 : vector<16x128xf32>
    %584 = arith.addf %550, %583 : vector<16x128xf32>
    %c207 = arith.constant 207 : index
    %585 = memref.load %arg3[%c207] : memref<224xf32, #tpu.memory_space<smem>>
    %586 = vector.broadcast %585 : f32 to vector<16x128xf32>
    %587 = arith.mulf %556, %586 : vector<16x128xf32>
    %588 = arith.addf %554, %587 : vector<16x128xf32>
    %589 = vector.extract_strided_slice %8 {offsets = [2, 6, 0], sizes = [1, 16, 128], strides = [1, 1, 1]} : vector<4x24x128xf32> to vector<1x16x128xf32>
    %590 = vector.shape_cast %589 : vector<1x16x128xf32> to vector<16x128xf32>
    %c208 = arith.constant 208 : index
    %591 = memref.load %arg3[%c208] : memref<224xf32, #tpu.memory_space<smem>>
    %592 = vector.broadcast %591 : f32 to vector<16x128xf32>
    %593 = arith.mulf %590, %592 : vector<16x128xf32>
    %594 = arith.addf %560, %593 : vector<16x128xf32>
    %c209 = arith.constant 209 : index
    %595 = memref.load %arg3[%c209] : memref<224xf32, #tpu.memory_space<smem>>
    %596 = vector.broadcast %595 : f32 to vector<16x128xf32>
    %597 = arith.mulf %590, %596 : vector<16x128xf32>
    %598 = arith.addf %564, %597 : vector<16x128xf32>
    %c210 = arith.constant 210 : index
    %599 = memref.load %arg3[%c210] : memref<224xf32, #tpu.memory_space<smem>>
    %600 = vector.broadcast %599 : f32 to vector<16x128xf32>
    %601 = arith.mulf %590, %600 : vector<16x128xf32>
    %602 = arith.addf %568, %601 : vector<16x128xf32>
    %c211 = arith.constant 211 : index
    %603 = memref.load %arg3[%c211] : memref<224xf32, #tpu.memory_space<smem>>
    %604 = vector.broadcast %603 : f32 to vector<16x128xf32>
    %605 = arith.mulf %590, %604 : vector<16x128xf32>
    %606 = arith.addf %572, %605 : vector<16x128xf32>
    %c212 = arith.constant 212 : index
    %607 = memref.load %arg3[%c212] : memref<224xf32, #tpu.memory_space<smem>>
    %608 = vector.broadcast %607 : f32 to vector<16x128xf32>
    %609 = arith.mulf %590, %608 : vector<16x128xf32>
    %610 = arith.addf %576, %609 : vector<16x128xf32>
    %c213 = arith.constant 213 : index
    %611 = memref.load %arg3[%c213] : memref<224xf32, #tpu.memory_space<smem>>
    %612 = vector.broadcast %611 : f32 to vector<16x128xf32>
    %613 = arith.mulf %590, %612 : vector<16x128xf32>
    %614 = arith.addf %580, %613 : vector<16x128xf32>
    %c214 = arith.constant 214 : index
    %615 = memref.load %arg3[%c214] : memref<224xf32, #tpu.memory_space<smem>>
    %616 = vector.broadcast %615 : f32 to vector<16x128xf32>
    %617 = arith.mulf %590, %616 : vector<16x128xf32>
    %618 = arith.addf %584, %617 : vector<16x128xf32>
    %c215 = arith.constant 215 : index
    %619 = memref.load %arg3[%c215] : memref<224xf32, #tpu.memory_space<smem>>
    %620 = vector.broadcast %619 : f32 to vector<16x128xf32>
    %621 = arith.mulf %590, %620 : vector<16x128xf32>
    %622 = arith.addf %588, %621 : vector<16x128xf32>
    %623 = vector.extract_strided_slice %8 {offsets = [3, 6, 0], sizes = [1, 16, 128], strides = [1, 1, 1]} : vector<4x24x128xf32> to vector<1x16x128xf32>
    %624 = vector.shape_cast %623 : vector<1x16x128xf32> to vector<16x128xf32>
    %c216 = arith.constant 216 : index
    %625 = memref.load %arg3[%c216] : memref<224xf32, #tpu.memory_space<smem>>
    %626 = vector.broadcast %625 : f32 to vector<16x128xf32>
    %627 = arith.mulf %624, %626 : vector<16x128xf32>
    %628 = arith.addf %594, %627 : vector<16x128xf32>
    %c217 = arith.constant 217 : index
    %629 = memref.load %arg3[%c217] : memref<224xf32, #tpu.memory_space<smem>>
    %630 = vector.broadcast %629 : f32 to vector<16x128xf32>
    %631 = arith.mulf %624, %630 : vector<16x128xf32>
    %632 = arith.addf %598, %631 : vector<16x128xf32>
    %c218 = arith.constant 218 : index
    %633 = memref.load %arg3[%c218] : memref<224xf32, #tpu.memory_space<smem>>
    %634 = vector.broadcast %633 : f32 to vector<16x128xf32>
    %635 = arith.mulf %624, %634 : vector<16x128xf32>
    %636 = arith.addf %602, %635 : vector<16x128xf32>
    %c219 = arith.constant 219 : index
    %637 = memref.load %arg3[%c219] : memref<224xf32, #tpu.memory_space<smem>>
    %638 = vector.broadcast %637 : f32 to vector<16x128xf32>
    %639 = arith.mulf %624, %638 : vector<16x128xf32>
    %640 = arith.addf %606, %639 : vector<16x128xf32>
    %c220 = arith.constant 220 : index
    %641 = memref.load %arg3[%c220] : memref<224xf32, #tpu.memory_space<smem>>
    %642 = vector.broadcast %641 : f32 to vector<16x128xf32>
    %643 = arith.mulf %624, %642 : vector<16x128xf32>
    %644 = arith.addf %610, %643 : vector<16x128xf32>
    %c221 = arith.constant 221 : index
    %645 = memref.load %arg3[%c221] : memref<224xf32, #tpu.memory_space<smem>>
    %646 = vector.broadcast %645 : f32 to vector<16x128xf32>
    %647 = arith.mulf %624, %646 : vector<16x128xf32>
    %648 = arith.addf %614, %647 : vector<16x128xf32>
    %c222 = arith.constant 222 : index
    %649 = memref.load %arg3[%c222] : memref<224xf32, #tpu.memory_space<smem>>
    %650 = vector.broadcast %649 : f32 to vector<16x128xf32>
    %651 = arith.mulf %624, %650 : vector<16x128xf32>
    %652 = arith.addf %618, %651 : vector<16x128xf32>
    %c223 = arith.constant 223 : index
    %653 = memref.load %arg3[%c223] : memref<224xf32, #tpu.memory_space<smem>>
    %654 = vector.broadcast %653 : f32 to vector<16x128xf32>
    %655 = arith.mulf %624, %654 : vector<16x128xf32>
    %656 = arith.addf %622, %655 : vector<16x128xf32>
    %c0_6 = arith.constant 0 : index
    %657 = arith.index_cast %4 : i32 to index
    %c0_7 = arith.constant 0 : index
    %658 = vector.load %arg5[%c0_6, %657, %c0_7] : memref<8x16x128xf32, #tpu.memory_space<vmem>>, vector<1x16x128xf32>
    %659 = vector.shape_cast %658 : vector<1x16x128xf32> to vector<16x128xf32>
    %660 = vector.shape_cast %628 : vector<16x128xf32> to vector<1x16x128xf32>
    tpu.vector_store %arg5[%c0_6, %657, %c0_7], %660 {strides = array<i32>} : memref<8x16x128xf32, #tpu.memory_space<vmem>>, vector<1x16x128xf32>,
    %c1_8 = arith.constant 1 : index
    %661 = arith.index_cast %4 : i32 to index
    %c0_9 = arith.constant 0 : index
    %662 = vector.load %arg5[%c1_8, %661, %c0_9] : memref<8x16x128xf32, #tpu.memory_space<vmem>>, vector<1x16x128xf32>
    %663 = vector.shape_cast %662 : vector<1x16x128xf32> to vector<16x128xf32>
    %664 = vector.shape_cast %632 : vector<16x128xf32> to vector<1x16x128xf32>
    tpu.vector_store %arg5[%c1_8, %661, %c0_9], %664 {strides = array<i32>} : memref<8x16x128xf32, #tpu.memory_space<vmem>>, vector<1x16x128xf32>,
    %c2_10 = arith.constant 2 : index
    %665 = arith.index_cast %4 : i32 to index
    %c0_11 = arith.constant 0 : index
    %666 = vector.load %arg5[%c2_10, %665, %c0_11] : memref<8x16x128xf32, #tpu.memory_space<vmem>>, vector<1x16x128xf32>
    %667 = vector.shape_cast %666 : vector<1x16x128xf32> to vector<16x128xf32>
    %668 = vector.shape_cast %636 : vector<16x128xf32> to vector<1x16x128xf32>
    tpu.vector_store %arg5[%c2_10, %665, %c0_11], %668 {strides = array<i32>} : memref<8x16x128xf32, #tpu.memory_space<vmem>>, vector<1x16x128xf32>,
    %c3_12 = arith.constant 3 : index
    %669 = arith.index_cast %4 : i32 to index
    %c0_13 = arith.constant 0 : index
    %670 = vector.load %arg5[%c3_12, %669, %c0_13] : memref<8x16x128xf32, #tpu.memory_space<vmem>>, vector<1x16x128xf32>
    %671 = vector.shape_cast %670 : vector<1x16x128xf32> to vector<16x128xf32>
    %672 = vector.shape_cast %640 : vector<16x128xf32> to vector<1x16x128xf32>
    tpu.vector_store %arg5[%c3_12, %669, %c0_13], %672 {strides = array<i32>} : memref<8x16x128xf32, #tpu.memory_space<vmem>>, vector<1x16x128xf32>,
    %c4_14 = arith.constant 4 : index
    %673 = arith.index_cast %4 : i32 to index
    %c0_15 = arith.constant 0 : index
    %674 = vector.load %arg5[%c4_14, %673, %c0_15] : memref<8x16x128xf32, #tpu.memory_space<vmem>>, vector<1x16x128xf32>
    %675 = vector.shape_cast %674 : vector<1x16x128xf32> to vector<16x128xf32>
    %676 = vector.shape_cast %644 : vector<16x128xf32> to vector<1x16x128xf32>
    tpu.vector_store %arg5[%c4_14, %673, %c0_15], %676 {strides = array<i32>} : memref<8x16x128xf32, #tpu.memory_space<vmem>>, vector<1x16x128xf32>,
    %c5_16 = arith.constant 5 : index
    %677 = arith.index_cast %4 : i32 to index
    %c0_17 = arith.constant 0 : index
    %678 = vector.load %arg5[%c5_16, %677, %c0_17] : memref<8x16x128xf32, #tpu.memory_space<vmem>>, vector<1x16x128xf32>
    %679 = vector.shape_cast %678 : vector<1x16x128xf32> to vector<16x128xf32>
    %680 = vector.shape_cast %648 : vector<16x128xf32> to vector<1x16x128xf32>
    tpu.vector_store %arg5[%c5_16, %677, %c0_17], %680 {strides = array<i32>} : memref<8x16x128xf32, #tpu.memory_space<vmem>>, vector<1x16x128xf32>,
    %c6_18 = arith.constant 6 : index
    %681 = arith.index_cast %4 : i32 to index
    %c0_19 = arith.constant 0 : index
    %682 = vector.load %arg5[%c6_18, %681, %c0_19] : memref<8x16x128xf32, #tpu.memory_space<vmem>>, vector<1x16x128xf32>
    %683 = vector.shape_cast %682 : vector<1x16x128xf32> to vector<16x128xf32>
    %684 = vector.shape_cast %652 : vector<16x128xf32> to vector<1x16x128xf32>
    tpu.vector_store %arg5[%c6_18, %681, %c0_19], %684 {strides = array<i32>} : memref<8x16x128xf32, #tpu.memory_space<vmem>>, vector<1x16x128xf32>,
    %c7_20 = arith.constant 7 : index
    %685 = arith.index_cast %4 : i32 to index
    %c0_21 = arith.constant 0 : index
    %686 = vector.load %arg5[%c7_20, %685, %c0_21] : memref<8x16x128xf32, #tpu.memory_space<vmem>>, vector<1x16x128xf32>
    %687 = vector.shape_cast %686 : vector<1x16x128xf32> to vector<16x128xf32>
    %688 = vector.shape_cast %656 : vector<16x128xf32> to vector<1x16x128xf32>
    tpu.vector_store %arg5[%c7_20, %685, %c0_21], %688 {strides = array<i32>} : memref<8x16x128xf32, #tpu.memory_space<vmem>>, vector<1x16x128xf32>,
    %c1_i32_22 = arith.constant 1 : i32
    return
  }
  func.func @transform_0(%arg0: i32, %arg1: i32) -> (i32, i32, i32) {
    %c0_i32 = arith.constant 0 : i32
    %c0_i32_0 = arith.constant 0 : i32
    %c0_i32_1 = arith.constant 0 : i32
    return %c0_i32, %c0_i32_0, %arg0 : i32, i32, i32
  }
  func.func @transform_1(%arg0: i32, %arg1: i32) -> i32 {
    %c0_i32 = arith.constant 0 : i32
    %c0_i32_0 = arith.constant 0 : i32
    return %c0_i32 : i32
  }
  func.func @transform_2(%arg0: i32, %arg1: i32) -> i32 {
    %c0_i32 = arith.constant 0 : i32
    %c0_i32_0 = arith.constant 0 : i32
    return %c0_i32 : i32
  }
  func.func @transform_3(%arg0: i32, %arg1: i32) -> (i32, i32, i32) {
    %c0_i32 = arith.constant 0 : i32
    %c0_i32_0 = arith.constant 0 : i32
    return %c0_i32, %arg1, %arg0 : i32, i32, i32
  }
}

</mosaic_0001>

<llo_original>
// kernel: tpu_custom_call.1
$region0: #{tpu_custom_call.1}
  #allocation0 [shape = 'u32[]', space=smem, size = 0x4, offset = 0x4, fixed_abs, tag = 'smem constant byte address 0x4 - core index']
  #allocation1 [shape = 'u32[72,128]{1,0:T(1,128)}', space=vmem, size = 0x9000, scoped, tag = 'internal scratch']
  %s0 = inlined_call_operand.hbm [shape: f32[4,24,128], index: 0, kind: input, shape index: {}]
  %s1 = inlined_call_operand.hbm [shape: f32[224], index: 1, kind: input, shape index: {}]
  %s2 = inlined_call_operand.vmem [shape: f32[8], index: 2, kind: input, shape index: {}]
  %s3 = inlined_call_operand.hbm [shape: f32[8,16,128], index: 3, kind: output, shape index: {}]
  %s4 = sld [smem:[#allocation0]]
  $region34: #{tpu_custom_call.1} parent=0
    _
  %s6 = ssub.s32 1, %s4
  %s7 = scalar_select 0, %s6, %s4
  $region1: #{tpu_custom_call.1} parent=0
    #allocation2 [shape = 'u8[49152]{0}', space=vmem, size = 0xc000, scoped, tag = 'input window, operand 0, single buffered']
    #allocation3 [shape = 's32[1]{0}', space=sflag, size = 0x4, scoped, tag = 'scoped memory for tpu_custom_call.1']
    #allocation4 [shape = 's32[1]{0}', space=sflag, size = 0x4, scoped, tag = 'scoped memory for tpu_custom_call.1']
    #allocation5 [shape = 's32[1]{0}', space=sflag, size = 0x4, scoped, tag = 'scoped memory for tpu_custom_call.1']
    #allocation6 [shape = 's32[1]{0}', space=sflag, size = 0x4, scoped, tag = 'scoped memory for tpu_custom_call.1']
    #allocation7 [shape = 'u8[1024]{0}', space=smem, size = 0x400, scoped, tag = 'input window, operand 1, single buffered']
    #allocation8 [shape = 'u8[512]{0}', space=smem, size = 0x200, scoped, tag = 'input window, operand 2, single buffered']
    #allocation9 [shape = 'u8[65536]{0}', space=vmem, size = 0x10000, scoped, tag = 'output window, operand 0, single buffered']
    %8 = vsyncpa [#allocation3], 0
    %9 = vsyncpa [#allocation5], 0
    %10 = vsyncpa [#allocation6], 0
    %11 = vsyncpa [#allocation4], 0
    // Predicated region
    $region2: #{tpu_custom_call.1} parent=1 // pred_check
      _
    $region3: #{tpu_custom_call.1} parent=1 // pred_check_branch
      %13 = sbr.rel (0) target = $region5
    $region4: #{tpu_custom_call.1} parent=1 // pred_region
      %15 = vsyncadd [#allocation3], 0
      %s16 = sshll.u32 %s0, 4
      %s17 = int_to_ptr.hbm [resolvable:$true] %s16
      %s18 = sshll.u32 [#allocation2], 4
      %s19 = int_to_ptr.vmem [resolvable:$true] %s18
      %24 = dma.hbm_to_vmem [thread:$0]  %s17, 1536, %s19, [#allocation3], 128, 128, 8
    $region5: #{tpu_custom_call.1} parent=1 // pred_fallthru
      _
    // Predicated region
    $region6: #{tpu_custom_call.1} parent=1 // pred_check
      _
    $region7: #{tpu_custom_call.1} parent=1 // pred_check_branch
      %26 = sbr.rel (0) target = $region9
    $region8: #{tpu_custom_call.1} parent=1 // pred_region
      %28 = vsyncadd [#allocation5], 0
      %s30 = sshll.u32 %s1, 4
      %s31 = int_to_ptr.hbm [resolvable:$true] %s30
      %33 = dma.hbm_to_smem %s31, 32, [#allocation7], [#allocation5]
    $region9: #{tpu_custom_call.1} parent=1 // pred_fallthru
      _
    // Predicated region
    $region10: #{tpu_custom_call.1} parent=1 // pred_check
      _
    $region11: #{tpu_custom_call.1} parent=1 // pred_check_branch
      %35 = sbr.rel (0) target = $region13
    $region12: #{tpu_custom_call.1} parent=1 // pred_region
      %37 = vsyncadd [#allocation6], 0
      %s39 = sshll.u32 %s2, 4
      %s40 = int_to_ptr.vmem [resolvable:$true] %s39
      %42 = dma.vmem_to_smem %s40, 16, [#allocation8], [#allocation6]
    $region13: #{tpu_custom_call.1} parent=1 // pred_fallthru
      _
    // Predicated region
    $region14: #{tpu_custom_call.1} parent=1 // pred_check
      _
    $region15: #{tpu_custom_call.1} parent=1 // pred_check_branch
      %44 = sbr.rel (0) target = $region17
    $region16: #{tpu_custom_call.1} parent=1 // pred_region
      %46 = dma.done [#allocation3], 1536
    $region17: #{tpu_custom_call.1} parent=1 // pred_fallthru
      _
    // Predicated region
    $region18: #{tpu_custom_call.1} parent=1 // pred_check
      _
    $region19: #{tpu_custom_call.1} parent=1 // pred_check_branch
      %48 = sbr.rel (0) target = $region21
    $region20: #{tpu_custom_call.1} parent=1 // pred_region
      %50 = dma.done [#allocation5], 32
    $region21: #{tpu_custom_call.1} parent=1 // pred_fallthru
      _
    // Predicated region
    $region22: #{tpu_custom_call.1} parent=1 // pred_check
      _
    $region23: #{tpu_custom_call.1} parent=1 // pred_check_branch
      %52 = sbr.rel (0) target = $region25
    $region24: #{tpu_custom_call.1} parent=1 // pred_region
      %54 = dma.done [#allocation6], 16
    $region25: #{tpu_custom_call.1} parent=1 // pred_fallthru
      _
    %55 = sfence
    %s56 = smul.u32 0, 16
    %s57 = sadd.s32 %s56, 0
    %s58 = scalar_lea.vmem [#allocation2], %s57
    %v59 = vld [vmem:[%s58] sm:$0xff]
    %v60 = vld [vmem:[%s58 + $0x8] sm:$0xff]
    %v61 = vld [vmem:[%s58 + $0x10] sm:$0xff]
    %v62 = vld [vmem:[%s58 + $0x18] sm:$0xff]
    %v63 = vld [vmem:[%s58 + $0x20] sm:$0xff]
    %v64 = vld [vmem:[%s58 + $0x28] sm:$0xff]
    %v65 = vld [vmem:[%s58 + $0x30] sm:$0xff]
    %v66 = vld [vmem:[%s58 + $0x38] sm:$0xff]
    %v67 = vld [vmem:[%s58 + $0x40] sm:$0xff]
    %v68 = vld [vmem:[%s58 + $0x48] sm:$0xff]
    %v69 = vld [vmem:[%s58 + $0x50] sm:$0xff]
    %v70 = vld [vmem:[%s58 + $0x58] sm:$0xff]
    %s71 = sld [smem:[#allocation8]]
    %v72 = vstv %s71
    %s73 = sld [smem:[#allocation8 + $0x1]]
    %v74 = vstv %s73
    %s75 = sld [smem:[#allocation8 + $0x2]]
    %v76 = vstv %s75
    %s77 = sld [smem:[#allocation8 + $0x3]]
    %v78 = vstv %s77
    %s79 = sld [smem:[#allocation8 + $0x4]]
    %v80 = vstv %s79
    %s81 = sld [smem:[#allocation8 + $0x5]]
    %v82 = vstv %s81
    %s83 = sld [smem:[#allocation8 + $0x6]]
    %v84 = vstv %s83
    %s85 = sld [smem:[#allocation8 + $0x7]]
    %v86 = vstv %s85
    %s87 = sld [smem:[#allocation7 + $0x6]]
    %v88 = vstv %s87
    %v89 = vmul.f32 %v59, %v88
    %v90 = vmul.f32 %v60, %v88
    %v91 = vadd.f32 %v84, %v89
    %v92 = vadd.f32 %v84, %v90
    %s93 = sld [smem:[#allocation7 + $0x7]]
    %v94 = vstv %s93
    %v95 = vmul.f32 %v59, %v94
    %v96 = vmul.f32 %v60, %v94
    %v97 = vadd.f32 %v86, %v95
    %v98 = vadd.f32 %v86, %v96
    %s99 = sld [smem:[#allocation7 + $0xe]]
    %v100 = vstv %s99
    %v101 = vmul.f32 %v62, %v100
    %v102 = vmul.f32 %v63, %v100
    %v103 = vadd.f32 %v91, %v101
    %v104 = vadd.f32 %v92, %v102
    %s105 = sld [smem:[#allocation7 + $0xf]]
    %v106 = vstv %s105
    %v107 = vmul.f32 %v62, %v106
    %v108 = vmul.f32 %v63, %v106
    %v109 = vadd.f32 %v97, %v107
    %v110 = vadd.f32 %v98, %v108
    %s111 = sld [smem:[#allocation7 + $0x16]]
    %v112 = vstv %s111
    %v113 = vmul.f32 %v65, %v112
    %v114 = vmul.f32 %v66, %v112
    %v115 = vadd.f32 %v103, %v113
    %v116 = vadd.f32 %v104, %v114
    %s117 = sld [smem:[#allocation7 + $0x17]]
    %v118 = vstv %s117
    %v119 = vmul.f32 %v65, %v118
    %v120 = vmul.f32 %v66, %v118
    %v121 = vadd.f32 %v109, %v119
    %v122 = vadd.f32 %v110, %v120
    %s123 = sld [smem:[#allocation7 + $0x1e]]
    %v124 = vstv %s123
    %v125 = vmul.f32 %v68, %v124
    %v126 = vmul.f32 %v69, %v124
    %v127 = vadd.f32 %v115, %v125
    %v128 = vadd.f32 %v116, %v126
    %s129 = sld [smem:[#allocation7 + $0x1f]]
    %v130 = vstv %s129
    %v131 = vmul.f32 %v68, %v130
    %v132 = vmul.f32 %v69, %v130
    %v133 = vadd.f32 %v121, %v131
    %v134 = vadd.f32 %v122, %v132
    %s135 = sld [smem:[#allocation7 + $0x24]]
    %v136 = vstv %s135
    %v137 = vmul.f32 %v59, %v136
    %v138 = vmul.f32 %v60, %v136
    %v139 = vmul.f32 %v61, %v136
    %v140 = vadd.f32 %v80, %v137
    %v141 = vadd.f32 %v80, %v138
    %v142 = vadd.f32 %v80, %v139
    %s143 = sld [smem:[#allocation7 + $0x25]]
    %v144 = vstv %s143
    %v145 = vmul.f32 %v59, %v144
    %v146 = vmul.f32 %v60, %v144
    %v147 = vmul.f32 %v61, %v144
    %v148 = vadd.f32 %v82, %v145
    %v149 = vadd.f32 %v82, %v146
    %v150 = vadd.f32 %v82, %v147
    %s151 = sld [smem:[#allocation7 + $0x26]]
    %v152 = vstv %s151
    %v153 = vmul.f32 %v59, %v152
    %v154 = vmul.f32 %v60, %v152
    %v155 = vmul.f32 %v61, %v152
    %vm159 = vcmask 1046528
    %v160 = vrot.slane %v153, 1
    %v161 = vrot.slane %v154, 1
    %v162 = vsel %vm159, %v160, %v161
    %v163 = vrot.slane %v155, 1
    %v164 = vsel %vm159, %v161, %v163
    %v167 = vadd.f32 %v127, %v162
    %v168 = vadd.f32 %v128, %v164
    %s169 = sld [smem:[#allocation7 + $0x27]]
    %v170 = vstv %s169
    %v171 = vmul.f32 %v59, %v170
    %v172 = vmul.f32 %v60, %v170
    %v173 = vmul.f32 %v61, %v170
    %v177 = vrot.slane %v171, 1
    %v178 = vrot.slane %v172, 1
    %v179 = vsel %vm159, %v177, %v178
    %v180 = vrot.slane %v173, 1
    %v181 = vsel %vm159, %v178, %v180
    %v184 = vadd.f32 %v133, %v179
    %v185 = vadd.f32 %v134, %v181
    %s186 = sld [smem:[#allocation7 + $0x2c]]
    %v187 = vstv %s186
    %v188 = vmul.f32 %v62, %v187
    %v189 = vmul.f32 %v63, %v187
    %v190 = vmul.f32 %v64, %v187
    %v191 = vadd.f32 %v140, %v188
    %v192 = vadd.f32 %v141, %v189
    %v193 = vadd.f32 %v142, %v190
    %s194 = sld [smem:[#allocation7 + $0x2d]]
    %v195 = vstv %s194
    %v196 = vmul.f32 %v62, %v195
    %v197 = vmul.f32 %v63, %v195
    %v198 = vmul.f32 %v64, %v195
    %v199 = vadd.f32 %v148, %v196
    %v200 = vadd.f32 %v149, %v197
    %v201 = vadd.f32 %v150, %v198
    %s202 = sld [smem:[#allocation7 + $0x2e]]
    %v203 = vstv %s202
    %v204 = vmul.f32 %v62, %v203
    %v205 = vmul.f32 %v63, %v203
    %v206 = vmul.f32 %v64, %v203
    %v210 = vrot.slane %v204, 1
    %v211 = vrot.slane %v205, 1
    %v212 = vsel %vm159, %v210, %v211
    %v213 = vrot.slane %v206, 1
    %v214 = vsel %vm159, %v211, %v213
    %v217 = vadd.f32 %v167, %v212
    %v218 = vadd.f32 %v168, %v214
    %s219 = sld [smem:[#allocation7 + $0x2f]]
    %v220 = vstv %s219
    %v221 = vmul.f32 %v62, %v220
    %v222 = vmul.f32 %v63, %v220
    %v223 = vmul.f32 %v64, %v220
    %v227 = vrot.slane %v221, 1
    %v228 = vrot.slane %v222, 1
    %v229 = vsel %vm159, %v227, %v228
    %v230 = vrot.slane %v223, 1
    %v231 = vsel %vm159, %v228, %v230
    %v234 = vadd.f32 %v184, %v229
    %v235 = vadd.f32 %v185, %v231
    %s236 = sld [smem:[#allocation7 + $0x34]]
    %v237 = vstv %s236
    %v238 = vmul.f32 %v65, %v237
    %v239 = vmul.f32 %v66, %v237
    %v240 = vmul.f32 %v67, %v237
    %v241 = vadd.f32 %v191, %v238
    %v242 = vadd.f32 %v192, %v239
    %v243 = vadd.f32 %v193, %v240
    %s244 = sld [smem:[#allocation7 + $0x35]]
    %v245 = vstv %s244
    %v246 = vmul.f32 %v65, %v245
    %v247 = vmul.f32 %v66, %v245
    %v248 = vmul.f32 %v67, %v245
    %v249 = vadd.f32 %v199, %v246
    %v250 = vadd.f32 %v200, %v247
    %v251 = vadd.f32 %v201, %v248
    %s252 = sld [smem:[#allocation7 + $0x36]]
    %v253 = vstv %s252
    %v254 = vmul.f32 %v65, %v253
    %v255 = vmul.f32 %v66, %v253
    %v256 = vmul.f32 %v67, %v253
    %v260 = vrot.slane %v254, 1
    %v261 = vrot.slane %v255, 1
    %v262 = vsel %vm159, %v260, %v261
    %v263 = vrot.slane %v256, 1
    %v264 = vsel %vm159, %v261, %v263
    %v267 = vadd.f32 %v217, %v262
    %v268 = vadd.f32 %v218, %v264
    %s269 = sld [smem:[#allocation7 + $0x37]]
    %v270 = vstv %s269
    %v271 = vmul.f32 %v65, %v270
    %v272 = vmul.f32 %v66, %v270
    %v273 = vmul.f32 %v67, %v270
    %v277 = vrot.slane %v271, 1
    %v278 = vrot.slane %v272, 1
    %v279 = vsel %vm159, %v277, %v278
    %v280 = vrot.slane %v273, 1
    %v281 = vsel %vm159, %v278, %v280
    %v284 = vadd.f32 %v234, %v279
    %v285 = vadd.f32 %v235, %v281
    %s286 = sld [smem:[#allocation7 + $0x3c]]
    %v287 = vstv %s286
    %v288 = vmul.f32 %v68, %v287
    %v289 = vmul.f32 %v69, %v287
    %v290 = vmul.f32 %v70, %v287
    %v291 = vadd.f32 %v241, %v288
    %v292 = vadd.f32 %v242, %v289
    %v293 = vadd.f32 %v243, %v290
    %s294 = sld [smem:[#allocation7 + $0x3d]]
    %v295 = vstv %s294
    %v296 = vmul.f32 %v68, %v295
    %v297 = vmul.f32 %v69, %v295
    %v298 = vmul.f32 %v70, %v295
    %v299 = vadd.f32 %v249, %v296
    %v300 = vadd.f32 %v250, %v297
    %v301 = vadd.f32 %v251, %v298
    %s302 = sld [smem:[#allocation7 + $0x3e]]
    %v303 = vstv %s302
    %v304 = vmul.f32 %v68, %v303
    %v305 = vmul.f32 %v69, %v303
    %v306 = vmul.f32 %v70, %v303
    %v310 = vrot.slane %v304, 1
    %v311 = vrot.slane %v305, 1
    %v312 = vsel %vm159, %v310, %v311
    %v313 = vrot.slane %v306, 1
    %v314 = vsel %vm159, %v311, %v313
    %v317 = vadd.f32 %v267, %v312
    %v318 = vadd.f32 %v268, %v314
    %s319 = sld [smem:[#allocation7 + $0x3f]]
    %v320 = vstv %s319
    %v321 = vmul.f32 %v68, %v320
    %v322 = vmul.f32 %v69, %v320
    %v323 = vmul.f32 %v70, %v320
    %v327 = vrot.slane %v321, 1
    %v328 = vrot.slane %v322, 1
    %v329 = vsel %vm159, %v327, %v328
    %v330 = vrot.slane %v323, 1
    %v331 = vsel %vm159, %v328, %v330
    %v334 = vadd.f32 %v284, %v329
    %v335 = vadd.f32 %v285, %v331
    %s336 = sld [smem:[#allocation7 + $0x44]]
    %v337 = vstv %s336
    %v338 = vmul.f32 %v59, %v337
    %v339 = vmul.f32 %v60, %v337
    %v340 = vmul.f32 %v61, %v337
    %v344 = vrot.slane %v338, 1
    %v345 = vrot.slane %v339, 1
    %v346 = vsel %vm159, %v344, %v345
    %v347 = vrot.slane %v340, 1
    %v348 = vsel %vm159, %v345, %v347
    %v352 = vadd.f32 %v291, %v346
    %v353 = vadd.f32 %v292, %v348
    %v354 = vadd.f32 %v293, %v347
    %s355 = sld [smem:[#allocation7 + $0x45]]
    %v356 = vstv %s355
    %v357 = vmul.f32 %v59, %v356
    %v358 = vmul.f32 %v60, %v356
    %v359 = vmul.f32 %v61, %v356
    %v363 = vrot.slane %v357, 1
    %v364 = vrot.slane %v358, 1
    %v365 = vsel %vm159, %v363, %v364
    %v366 = vrot.slane %v359, 1
    %v367 = vsel %vm159, %v364, %v366
    %v371 = vadd.f32 %v299, %v365
    %v372 = vadd.f32 %v300, %v367
    %v373 = vadd.f32 %v301, %v366
    %s374 = sld [smem:[#allocation7 + $0x46]]
    %v375 = vstv %s374
    %v376 = vmul.f32 %v59, %v375
    %v377 = vmul.f32 %v60, %v375
    %v378 = vmul.f32 %v61, %v375
    %vm382 = vcmask 1045504
    %v383 = vrot.slane %v376, 2
    %v384 = vrot.slane %v377, 2
    %v385 = vsel %vm382, %v383, %v384
    %v386 = vrot.slane %v378, 2
    %v387 = vsel %vm382, %v384, %v386
    %v390 = vadd.f32 %v317, %v385
    %v391 = vadd.f32 %v318, %v387
    %s392 = sld [smem:[#allocation7 + $0x47]]
    %v393 = vstv %s392
    %v394 = vmul.f32 %v59, %v393
    %v395 = vmul.f32 %v60, %v393
    %v396 = vmul.f32 %v61, %v393
    %v400 = vrot.slane %v394, 2
    %v401 = vrot.slane %v395, 2
    %v402 = vsel %vm382, %v400, %v401
    %v403 = vrot.slane %v396, 2
    %v404 = vsel %vm382, %v401, %v403
    %v407 = vadd.f32 %v334, %v402
    %v408 = vadd.f32 %v335, %v404
    %s409 = sld [smem:[#allocation7 + $0x4c]]
    %v410 = vstv %s409
    %v411 = vmul.f32 %v62, %v410
    %v412 = vmul.f32 %v63, %v410
    %v413 = vmul.f32 %v64, %v410
    %v417 = vrot.slane %v411, 1
    %v418 = vrot.slane %v412, 1
    %v419 = vsel %vm159, %v417, %v418
    %v420 = vrot.slane %v413, 1
    %v421 = vsel %vm159, %v418, %v420
    %v425 = vadd.f32 %v352, %v419
    %v426 = vadd.f32 %v353, %v421
    %v427 = vadd.f32 %v354, %v420
    %s428 = sld [smem:[#allocation7 + $0x4d]]
    %v429 = vstv %s428
    %v430 = vmul.f32 %v62, %v429
    %v431 = vmul.f32 %v63, %v429
    %v432 = vmul.f32 %v64, %v429
    %v436 = vrot.slane %v430, 1
    %v437 = vrot.slane %v431, 1
    %v438 = vsel %vm159, %v436, %v437
    %v439 = vrot.slane %v432, 1
    %v440 = vsel %vm159, %v437, %v439
    %v444 = vadd.f32 %v371, %v438
    %v445 = vadd.f32 %v372, %v440
    %v446 = vadd.f32 %v373, %v439
    %s447 = sld [smem:[#allocation7 + $0x4e]]
    %v448 = vstv %s447
    %v449 = vmul.f32 %v62, %v448
    %v450 = vmul.f32 %v63, %v448
    %v451 = vmul.f32 %v64, %v448
    %v455 = vrot.slane %v449, 2
    %v456 = vrot.slane %v450, 2
    %v457 = vsel %vm382, %v455, %v456
    %v458 = vrot.slane %v451, 2
    %v459 = vsel %vm382, %v456, %v458
    %v462 = vadd.f32 %v390, %v457
    %v463 = vadd.f32 %v391, %v459
    %s464 = sld [smem:[#allocation7 + $0x4f]]
    %v465 = vstv %s464
    %v466 = vmul.f32 %v62, %v465
    %v467 = vmul.f32 %v63, %v465
    %v468 = vmul.f32 %v64, %v465
    %v472 = vrot.slane %v466, 2
    %v473 = vrot.slane %v467, 2
    %v474 = vsel %vm382, %v472, %v473
    %v475 = vrot.slane %v468, 2
    %v476 = vsel %vm382, %v473, %v475
    %v479 = vadd.f32 %v407, %v474
    %v480 = vadd.f32 %v408, %v476
    %s481 = sld [smem:[#allocation7 + $0x54]]
    %v482 = vstv %s481
    %v483 = vmul.f32 %v65, %v482
    %v484 = vmul.f32 %v66, %v482
    %v485 = vmul.f32 %v67, %v482
    %v489 = vrot.slane %v483, 1
    %v490 = vrot.slane %v484, 1
    %v491 = vsel %vm159, %v489, %v490
    %v492 = vrot.slane %v485, 1
    %v493 = vsel %vm159, %v490, %v492
    %v497 = vadd.f32 %v425, %v491
    %v498 = vadd.f32 %v426, %v493
    %v499 = vadd.f32 %v427, %v492
    %s500 = sld [smem:[#allocation7 + $0x55]]
    %v501 = vstv %s500
    %v502 = vmul.f32 %v65, %v501
    %v503 = vmul.f32 %v66, %v501
    %v504 = vmul.f32 %v67, %v501
    %v508 = vrot.slane %v502, 1
    %v509 = vrot.slane %v503, 1
    %v510 = vsel %vm159, %v508, %v509
    %v511 = vrot.slane %v504, 1
    %v512 = vsel %vm159, %v509, %v511
    %v516 = vadd.f32 %v444, %v510
    %v517 = vadd.f32 %v445, %v512
    %v518 = vadd.f32 %v446, %v511
    %s519 = sld [smem:[#allocation7 + $0x56]]
    %v520 = vstv %s519
    %v521 = vmul.f32 %v65, %v520
    %v522 = vmul.f32 %v66, %v520
    %v523 = vmul.f32 %v67, %v520
    %v527 = vrot.slane %v521, 2
    %v528 = vrot.slane %v522, 2
    %v529 = vsel %vm382, %v527, %v528
    %v530 = vrot.slane %v523, 2
    %v531 = vsel %vm382, %v528, %v530
    %v534 = vadd.f32 %v462, %v529
    %v535 = vadd.f32 %v463, %v531
    %s536 = sld [smem:[#allocation7 + $0x57]]
    %v537 = vstv %s536
    %v538 = vmul.f32 %v65, %v537
    %v539 = vmul.f32 %v66, %v537
    %v540 = vmul.f32 %v67, %v537
    %v544 = vrot.slane %v538, 2
    %v545 = vrot.slane %v539, 2
    %v546 = vsel %vm382, %v544, %v545
    %v547 = vrot.slane %v540, 2
    %v548 = vsel %vm382, %v545, %v547
    %v551 = vadd.f32 %v479, %v546
    %v552 = vadd.f32 %v480, %v548
    %s553 = sld [smem:[#allocation7 + $0x5c]]
    %v554 = vstv %s553
    %v555 = vmul.f32 %v68, %v554
    %v556 = vmul.f32 %v69, %v554
    %v557 = vmul.f32 %v70, %v554
    %v561 = vrot.slane %v555, 1
    %v562 = vrot.slane %v556, 1
    %v563 = vsel %vm159, %v561, %v562
    %v564 = vrot.slane %v557, 1
    %v565 = vsel %vm159, %v562, %v564
    %v569 = vadd.f32 %v497, %v563
    %v570 = vadd.f32 %v498, %v565
    %v571 = vadd.f32 %v499, %v564
    %s572 = sld [smem:[#allocation7 + $0x5d]]
    %v573 = vstv %s572
    %v574 = vmul.f32 %v68, %v573
    %v575 = vmul.f32 %v69, %v573
    %v576 = vmul.f32 %v70, %v573
    %v580 = vrot.slane %v574, 1
    %v581 = vrot.slane %v575, 1
    %v582 = vsel %vm159, %v580, %v581
    %v583 = vrot.slane %v576, 1
    %v584 = vsel %vm159, %v581, %v583
    %v588 = vadd.f32 %v516, %v582
    %v589 = vadd.f32 %v517, %v584
    %v590 = vadd.f32 %v518, %v583
    %s591 = sld [smem:[#allocation7 + $0x5e]]
    %v592 = vstv %s591
    %v593 = vmul.f32 %v68, %v592
    %v594 = vmul.f32 %v69, %v592
    %v595 = vmul.f32 %v70, %v592
    %v599 = vrot.slane %v593, 2
    %v600 = vrot.slane %v594, 2
    %v601 = vsel %vm382, %v599, %v600
    %v602 = vrot.slane %v595, 2
    %v603 = vsel %vm382, %v600, %v602
    %v606 = vadd.f32 %v534, %v601
    %v607 = vadd.f32 %v535, %v603
    %s608 = sld [smem:[#allocation7 + $0x5f]]
    %v609 = vstv %s608
    %v610 = vmul.f32 %v68, %v609
    %v611 = vmul.f32 %v69, %v609
    %v612 = vmul.f32 %v70, %v609
    %v616 = vrot.slane %v610, 2
    %v617 = vrot.slane %v611, 2
    %v618 = vsel %vm382, %v616, %v617
    %v619 = vrot.slane %v612, 2
    %v620 = vsel %vm382, %v617, %v619
    %v623 = vadd.f32 %v551, %v618
    %v624 = vadd.f32 %v552, %v620
    %s625 = sld [smem:[#allocation7 + $0x64]]
    %v626 = vstv %s625
    %v627 = vmul.f32 %v59, %v626
    %v628 = vmul.f32 %v60, %v626
    %v629 = vmul.f32 %v61, %v626
    %v633 = vrot.slane %v627, 2
    %v634 = vrot.slane %v628, 2
    %v635 = vsel %vm382, %v633, %v634
    %v636 = vrot.slane %v629, 2
    %v637 = vsel %vm382, %v634, %v636
    %v641 = vadd.f32 %v569, %v635
    %v642 = vadd.f32 %v570, %v637
    %v643 = vadd.f32 %v571, %v636
    %s644 = sld [smem:[#allocation7 + $0x65]]
    %v645 = vstv %s644
    %v646 = vmul.f32 %v59, %v645
    %v647 = vmul.f32 %v60, %v645
    %v648 = vmul.f32 %v61, %v645
    %v652 = vrot.slane %v646, 2
    %v653 = vrot.slane %v647, 2
    %v654 = vsel %vm382, %v652, %v653
    %v655 = vrot.slane %v648, 2
    %v656 = vsel %vm382, %v653, %v655
    %v660 = vadd.f32 %v588, %v654
    %v661 = vadd.f32 %v589, %v656
    %v662 = vadd.f32 %v590, %v655
    %s663 = sld [smem:[#allocation7 + $0x66]]
    %v664 = vstv %s663
    %v665 = vmul.f32 %v59, %v664
    %v666 = vmul.f32 %v60, %v664
    %v667 = vmul.f32 %v61, %v664
    %vm671 = vcmask 1044480
    %v672 = vrot.slane %v665, 3
    %v673 = vrot.slane %v666, 3
    %v674 = vsel %vm671, %v672, %v673
    %v675 = vrot.slane %v667, 3
    %v676 = vsel %vm671, %v673, %v675
    %v679 = vadd.f32 %v606, %v674
    %v680 = vadd.f32 %v607, %v676
    %s681 = sld [smem:[#allocation7 + $0x67]]
    %v682 = vstv %s681
    %v683 = vmul.f32 %v59, %v682
    %v684 = vmul.f32 %v60, %v682
    %v685 = vmul.f32 %v61, %v682
    %v689 = vrot.slane %v683, 3
    %v690 = vrot.slane %v684, 3
    %v691 = vsel %vm671, %v689, %v690
    %v692 = vrot.slane %v685, 3
    %v693 = vsel %vm671, %v690, %v692
    %v696 = vadd.f32 %v623, %v691
    %v697 = vadd.f32 %v624, %v693
    %s698 = sld [smem:[#allocation7 + $0x6c]]
    %v699 = vstv %s698
    %v700 = vmul.f32 %v62, %v699
    %v701 = vmul.f32 %v63, %v699
    %v702 = vmul.f32 %v64, %v699
    %v706 = vrot.slane %v700, 2
    %v707 = vrot.slane %v701, 2
    %v708 = vsel %vm382, %v706, %v707
    %v709 = vrot.slane %v702, 2
    %v710 = vsel %vm382, %v707, %v709
    %v714 = vadd.f32 %v641, %v708
    %v715 = vadd.f32 %v642, %v710
    %v716 = vadd.f32 %v643, %v709
    %s717 = sld [smem:[#allocation7 + $0x6d]]
    %v718 = vstv %s717
    %v719 = vmul.f32 %v62, %v718
    %v720 = vmul.f32 %v63, %v718
    %v721 = vmul.f32 %v64, %v718
    %v725 = vrot.slane %v719, 2
    %v726 = vrot.slane %v720, 2
    %v727 = vsel %vm382, %v725, %v726
    %v728 = vrot.slane %v721, 2
    %v729 = vsel %vm382, %v726, %v728
    %v733 = vadd.f32 %v660, %v727
    %v734 = vadd.f32 %v661, %v729
    %v735 = vadd.f32 %v662, %v728
    %s736 = sld [smem:[#allocation7 + $0x6e]]
    %v737 = vstv %s736
    %v738 = vmul.f32 %v62, %v737
    %v739 = vmul.f32 %v63, %v737
    %v740 = vmul.f32 %v64, %v737
    %v744 = vrot.slane %v738, 3
    %v745 = vrot.slane %v739, 3
    %v746 = vsel %vm671, %v744, %v745
    %v747 = vrot.slane %v740, 3
    %v748 = vsel %vm671, %v745, %v747
    %v751 = vadd.f32 %v679, %v746
    %v752 = vadd.f32 %v680, %v748
    %s753 = sld [smem:[#allocation7 + $0x6f]]
    %v754 = vstv %s753
    %v755 = vmul.f32 %v62, %v754
    %v756 = vmul.f32 %v63, %v754
    %v757 = vmul.f32 %v64, %v754
    %v761 = vrot.slane %v755, 3
    %v762 = vrot.slane %v756, 3
    %v763 = vsel %vm671, %v761, %v762
    %v764 = vrot.slane %v757, 3
    %v765 = vsel %vm671, %v762, %v764
    %v768 = vadd.f32 %v696, %v763
    %v769 = vadd.f32 %v697, %v765
    %s770 = sld [smem:[#allocation7 + $0x74]]
    %v771 = vstv %s770
    %v772 = vmul.f32 %v65, %v771
    %v773 = vmul.f32 %v66, %v771
    %v774 = vmul.f32 %v67, %v771
    %v778 = vrot.slane %v772, 2
    %v779 = vrot.slane %v773, 2
    %v780 = vsel %vm382, %v778, %v779
    %v781 = vrot.slane %v774, 2
    %v782 = vsel %vm382, %v779, %v781
    %v786 = vadd.f32 %v714, %v780
    %v787 = vadd.f32 %v715, %v782
    %v788 = vadd.f32 %v716, %v781
    %s789 = sld [smem:[#allocation7 + $0x75]]
    %v790 = vstv %s789
    %v791 = vmul.f32 %v65, %v790
    %v792 = vmul.f32 %v66, %v790
    %v793 = vmul.f32 %v67, %v790
    %v797 = vrot.slane %v791, 2
    %v798 = vrot.slane %v792, 2
    %v799 = vsel %vm382, %v797, %v798
    %v800 = vrot.slane %v793, 2
    %v801 = vsel %vm382, %v798, %v800
    %v805 = vadd.f32 %v733, %v799
    %v806 = vadd.f32 %v734, %v801
    %v807 = vadd.f32 %v735, %v800
    %s808 = sld [smem:[#allocation7 + $0x76]]
    %v809 = vstv %s808
    %v810 = vmul.f32 %v65, %v809
    %v811 = vmul.f32 %v66, %v809
    %v812 = vmul.f32 %v67, %v809
    %v816 = vrot.slane %v810, 3
    %v817 = vrot.slane %v811, 3
    %v818 = vsel %vm671, %v816, %v817
    %v819 = vrot.slane %v812, 3
    %v820 = vsel %vm671, %v817, %v819
    %v823 = vadd.f32 %v751, %v818
    %v824 = vadd.f32 %v752, %v820
    %s825 = sld [smem:[#allocation7 + $0x77]]
    %v826 = vstv %s825
    %v827 = vmul.f32 %v65, %v826
    %v828 = vmul.f32 %v66, %v826
    %v829 = vmul.f32 %v67, %v826
    %v833 = vrot.slane %v827, 3
    %v834 = vrot.slane %v828, 3
    %v835 = vsel %vm671, %v833, %v834
    %v836 = vrot.slane %v829, 3
    %v837 = vsel %vm671, %v834, %v836
    %v840 = vadd.f32 %v768, %v835
    %v841 = vadd.f32 %v769, %v837
    %s842 = sld [smem:[#allocation7 + $0x7c]]
    %v843 = vstv %s842
    %v844 = vmul.f32 %v68, %v843
    %v845 = vmul.f32 %v69, %v843
    %v846 = vmul.f32 %v70, %v843
    %v850 = vrot.slane %v844, 2
    %v851 = vrot.slane %v845, 2
    %v852 = vsel %vm382, %v850, %v851
    %v853 = vrot.slane %v846, 2
    %v854 = vsel %vm382, %v851, %v853
    %v858 = vadd.f32 %v786, %v852
    %v859 = vadd.f32 %v787, %v854
    %v860 = vadd.f32 %v788, %v853
    %s861 = sld [smem:[#allocation7 + $0x7d]]
    %v862 = vstv %s861
    %v863 = vmul.f32 %v68, %v862
    %v864 = vmul.f32 %v69, %v862
    %v865 = vmul.f32 %v70, %v862
    %v869 = vrot.slane %v863, 2
    %v870 = vrot.slane %v864, 2
    %v871 = vsel %vm382, %v869, %v870
    %v872 = vrot.slane %v865, 2
    %v873 = vsel %vm382, %v870, %v872
    %v877 = vadd.f32 %v805, %v871
    %v878 = vadd.f32 %v806, %v873
    %v879 = vadd.f32 %v807, %v872
    %s880 = sld [smem:[#allocation7 + $0x7e]]
    %v881 = vstv %s880
    %v882 = vmul.f32 %v68, %v881
    %v883 = vmul.f32 %v69, %v881
    %v884 = vmul.f32 %v70, %v881
    %v888 = vrot.slane %v882, 3
    %v889 = vrot.slane %v883, 3
    %v890 = vsel %vm671, %v888, %v889
    %v891 = vrot.slane %v884, 3
    %v892 = vsel %vm671, %v889, %v891
    %v895 = vadd.f32 %v823, %v890
    %v896 = vadd.f32 %v824, %v892
    %s897 = sld [smem:[#allocation7 + $0x7f]]
    %v898 = vstv %s897
    %v899 = vmul.f32 %v68, %v898
    %v900 = vmul.f32 %v69, %v898
    %v901 = vmul.f32 %v70, %v898
    %v905 = vrot.slane %v899, 3
    %v906 = vrot.slane %v900, 3
    %v907 = vsel %vm671, %v905, %v906
    %v908 = vrot.slane %v901, 3
    %v909 = vsel %vm671, %v906, %v908
    %v912 = vadd.f32 %v840, %v907
    %v913 = vadd.f32 %v841, %v909
    %s914 = sld [smem:[#allocation7 + $0x82]]
    %v915 = vstv %s914
    %v916 = vmul.f32 %v59, %v915
    %v917 = vmul.f32 %v60, %v915
    %v918 = vmul.f32 %v61, %v915
    %v919 = vadd.f32 %v76, %v916
    %v920 = vadd.f32 %v76, %v917
    %v921 = vadd.f32 %v76, %v918
    %s922 = sld [smem:[#allocation7 + $0x83]]
    %v923 = vstv %s922
    %v924 = vmul.f32 %v59, %v923
    %v925 = vmul.f32 %v60, %v923
    %v926 = vmul.f32 %v61, %v923
    %v927 = vadd.f32 %v78, %v924
    %v928 = vadd.f32 %v78, %v925
    %v929 = vadd.f32 %v78, %v926
    %s930 = sld [smem:[#allocation7 + $0x84]]
    %v931 = vstv %s930
    %v932 = vmul.f32 %v59, %v931
    %v933 = vmul.f32 %v60, %v931
    %v934 = vmul.f32 %v61, %v931
    %v938 = vrot.slane %v932, 3
    %v939 = vrot.slane %v933, 3
    %v940 = vsel %vm671, %v938, %v939
    %v941 = vrot.slane %v934, 3
    %v942 = vsel %vm671, %v939, %v941
    %v946 = vadd.f32 %v858, %v940
    %v947 = vadd.f32 %v859, %v942
    %v948 = vadd.f32 %v860, %v941
    %s949 = sld [smem:[#allocation7 + $0x85]]
    %v950 = vstv %s949
    %v951 = vmul.f32 %v59, %v950
    %v952 = vmul.f32 %v60, %v950
    %v953 = vmul.f32 %v61, %v950
    %v957 = vrot.slane %v951, 3
    %v958 = vrot.slane %v952, 3
    %v959 = vsel %vm671, %v957, %v958
    %v960 = vrot.slane %v953, 3
    %v961 = vsel %vm671, %v958, %v960
    %v965 = vadd.f32 %v877, %v959
    %v966 = vadd.f32 %v878, %v961
    %v967 = vadd.f32 %v879, %v960
    %s968 = sld [smem:[#allocation7 + $0x86]]
    %v969 = vstv %s968
    %v970 = vmul.f32 %v59, %v969
    %v971 = vmul.f32 %v60, %v969
    %v972 = vmul.f32 %v61, %v969
    %vm976 = vcmask 1043456
    %v977 = vrot.slane %v970, 4
    %v978 = vrot.slane %v971, 4
    %v979 = vsel %vm976, %v977, %v978
    %v980 = vrot.slane %v972, 4
    %v981 = vsel %vm976, %v978, %v980
    %v984 = vadd.f32 %v895, %v979
    %v985 = vadd.f32 %v896, %v981
    %s986 = sld [smem:[#allocation7 + $0x87]]
    %v987 = vstv %s986
    %v988 = vmul.f32 %v59, %v987
    %v989 = vmul.f32 %v60, %v987
    %v990 = vmul.f32 %v61, %v987
    %v994 = vrot.slane %v988, 4
    %v995 = vrot.slane %v989, 4
    %v996 = vsel %vm976, %v994, %v995
    %v997 = vrot.slane %v990, 4
    %v998 = vsel %vm976, %v995, %v997
    %v1001 = vadd.f32 %v912, %v996
    %v1002 = vadd.f32 %v913, %v998
    %s1003 = sld [smem:[#allocation7 + $0x8a]]
    %v1004 = vstv %s1003
    %v1005 = vmul.f32 %v62, %v1004
    %v1006 = vmul.f32 %v63, %v1004
    %v1007 = vmul.f32 %v64, %v1004
    %v1008 = vadd.f32 %v919, %v1005
    %v1009 = vadd.f32 %v920, %v1006
    %v1010 = vadd.f32 %v921, %v1007
    %s1011 = sld [smem:[#allocation7 + $0x8b]]
    %v1012 = vstv %s1011
    %v1013 = vmul.f32 %v62, %v1012
    %v1014 = vmul.f32 %v63, %v1012
    %v1015 = vmul.f32 %v64, %v1012
    %v1016 = vadd.f32 %v927, %v1013
    %v1017 = vadd.f32 %v928, %v1014
    %v1018 = vadd.f32 %v929, %v1015
    %s1019 = sld [smem:[#allocation7 + $0x8c]]
    %v1020 = vstv %s1019
    %v1021 = vmul.f32 %v62, %v1020
    %v1022 = vmul.f32 %v63, %v1020
    %v1023 = vmul.f32 %v64, %v1020
    %v1027 = vrot.slane %v1021, 3
    %v1028 = vrot.slane %v1022, 3
    %v1029 = vsel %vm671, %v1027, %v1028
    %v1030 = vrot.slane %v1023, 3
    %v1031 = vsel %vm671, %v1028, %v1030
    %v1035 = vadd.f32 %v946, %v1029
    %v1036 = vadd.f32 %v947, %v1031
    %v1037 = vadd.f32 %v948, %v1030
    %s1038 = sld [smem:[#allocation7 + $0x8d]]
    %v1039 = vstv %s1038
    %v1040 = vmul.f32 %v62, %v1039
    %v1041 = vmul.f32 %v63, %v1039
    %v1042 = vmul.f32 %v64, %v1039
    %v1046 = vrot.slane %v1040, 3
    %v1047 = vrot.slane %v1041, 3
    %v1048 = vsel %vm671, %v1046, %v1047
    %v1049 = vrot.slane %v1042, 3
    %v1050 = vsel %vm671, %v1047, %v1049
    %v1054 = vadd.f32 %v965, %v1048
    %v1055 = vadd.f32 %v966, %v1050
    %v1056 = vadd.f32 %v967, %v1049
    %s1057 = sld [smem:[#allocation7 + $0x8e]]
    %v1058 = vstv %s1057
    %v1059 = vmul.f32 %v62, %v1058
    %v1060 = vmul.f32 %v63, %v1058
    %v1061 = vmul.f32 %v64, %v1058
    %v1065 = vrot.slane %v1059, 4
    %v1066 = vrot.slane %v1060, 4
    %v1067 = vsel %vm976, %v1065, %v1066
    %v1068 = vrot.slane %v1061, 4
    %v1069 = vsel %vm976, %v1066, %v1068
    %v1072 = vadd.f32 %v984, %v1067
    %v1073 = vadd.f32 %v985, %v1069
    %s1074 = sld [smem:[#allocation7 + $0x8f]]
    %v1075 = vstv %s1074
    %v1076 = vmul.f32 %v62, %v1075
    %v1077 = vmul.f32 %v63, %v1075
    %v1078 = vmul.f32 %v64, %v1075
    %v1082 = vrot.slane %v1076, 4
    %v1083 = vrot.slane %v1077, 4
    %v1084 = vsel %vm976, %v1082, %v1083
    %v1085 = vrot.slane %v1078, 4
    %v1086 = vsel %vm976, %v1083, %v1085
    %v1089 = vadd.f32 %v1001, %v1084
    %v1090 = vadd.f32 %v1002, %v1086
    %s1091 = sld [smem:[#allocation7 + $0x92]]
    %v1092 = vstv %s1091
    %v1093 = vmul.f32 %v65, %v1092
    %v1094 = vmul.f32 %v66, %v1092
    %v1095 = vmul.f32 %v67, %v1092
    %v1096 = vadd.f32 %v1008, %v1093
    %v1097 = vadd.f32 %v1009, %v1094
    %v1098 = vadd.f32 %v1010, %v1095
    %s1099 = sld [smem:[#allocation7 + $0x93]]
    %v1100 = vstv %s1099
    %v1101 = vmul.f32 %v65, %v1100
    %v1102 = vmul.f32 %v66, %v1100
    %v1103 = vmul.f32 %v67, %v1100
    %v1104 = vadd.f32 %v1016, %v1101
    %v1105 = vadd.f32 %v1017, %v1102
    %v1106 = vadd.f32 %v1018, %v1103
    %s1107 = sld [smem:[#allocation7 + $0x94]]
    %v1108 = vstv %s1107
    %v1109 = vmul.f32 %v65, %v1108
    %v1110 = vmul.f32 %v66, %v1108
    %v1111 = vmul.f32 %v67, %v1108
    %v1115 = vrot.slane %v1109, 3
    %v1116 = vrot.slane %v1110, 3
    %v1117 = vsel %vm671, %v1115, %v1116
    %v1118 = vrot.slane %v1111, 3
    %v1119 = vsel %vm671, %v1116, %v1118
    %v1123 = vadd.f32 %v1035, %v1117
    %v1124 = vadd.f32 %v1036, %v1119
    %v1125 = vadd.f32 %v1037, %v1118
    %s1126 = sld [smem:[#allocation7 + $0x95]]
    %v1127 = vstv %s1126
    %v1128 = vmul.f32 %v65, %v1127
    %v1129 = vmul.f32 %v66, %v1127
    %v1130 = vmul.f32 %v67, %v1127
    %v1134 = vrot.slane %v1128, 3
    %v1135 = vrot.slane %v1129, 3
    %v1136 = vsel %vm671, %v1134, %v1135
    %v1137 = vrot.slane %v1130, 3
    %v1138 = vsel %vm671, %v1135, %v1137
    %v1142 = vadd.f32 %v1054, %v1136
    %v1143 = vadd.f32 %v1055, %v1138
    %v1144 = vadd.f32 %v1056, %v1137
    %s1145 = sld [smem:[#allocation7 + $0x96]]
    %v1146 = vstv %s1145
    %v1147 = vmul.f32 %v65, %v1146
    %v1148 = vmul.f32 %v66, %v1146
    %v1149 = vmul.f32 %v67, %v1146
    %v1153 = vrot.slane %v1147, 4
    %v1154 = vrot.slane %v1148, 4
    %v1155 = vsel %vm976, %v1153, %v1154
    %v1156 = vrot.slane %v1149, 4
    %v1157 = vsel %vm976, %v1154, %v1156
    %v1160 = vadd.f32 %v1072, %v1155
    %v1161 = vadd.f32 %v1073, %v1157
    %s1162 = sld [smem:[#allocation7 + $0x97]]
    %v1163 = vstv %s1162
    %v1164 = vmul.f32 %v65, %v1163
    %v1165 = vmul.f32 %v66, %v1163
    %v1166 = vmul.f32 %v67, %v1163
    %v1170 = vrot.slane %v1164, 4
    %v1171 = vrot.slane %v1165, 4
    %v1172 = vsel %vm976, %v1170, %v1171
    %v1173 = vrot.slane %v1166, 4
    %v1174 = vsel %vm976, %v1171, %v1173
    %v1177 = vadd.f32 %v1089, %v1172
    %v1178 = vadd.f32 %v1090, %v1174
    %s1179 = sld [smem:[#allocation7 + $0x9a]]
    %v1180 = vstv %s1179
    %v1181 = vmul.f32 %v68, %v1180
    %v1182 = vmul.f32 %v69, %v1180
    %v1183 = vmul.f32 %v70, %v1180
    %v1184 = vadd.f32 %v1096, %v1181
    %v1185 = vadd.f32 %v1097, %v1182
    %v1186 = vadd.f32 %v1098, %v1183
    %s1187 = sld [smem:[#allocation7 + $0x9b]]
    %v1188 = vstv %s1187
    %v1189 = vmul.f32 %v68, %v1188
    %v1190 = vmul.f32 %v69, %v1188
    %v1191 = vmul.f32 %v70, %v1188
    %v1192 = vadd.f32 %v1104, %v1189
    %v1193 = vadd.f32 %v1105, %v1190
    %v1194 = vadd.f32 %v1106, %v1191
    %s1195 = sld [smem:[#allocation7 + $0x9c]]
    %v1196 = vstv %s1195
    %v1197 = vmul.f32 %v68, %v1196
    %v1198 = vmul.f32 %v69, %v1196
    %v1199 = vmul.f32 %v70, %v1196
    %v1203 = vrot.slane %v1197, 3
    %v1204 = vrot.slane %v1198, 3
    %v1205 = vsel %vm671, %v1203, %v1204
    %v1206 = vrot.slane %v1199, 3
    %v1207 = vsel %vm671, %v1204, %v1206
    %v1211 = vadd.f32 %v1123, %v1205
    %v1212 = vadd.f32 %v1124, %v1207
    %v1213 = vadd.f32 %v1125, %v1206
    %s1214 = sld [smem:[#allocation7 + $0x9d]]
    %v1215 = vstv %s1214
    %v1216 = vmul.f32 %v68, %v1215
    %v1217 = vmul.f32 %v69, %v1215
    %v1218 = vmul.f32 %v70, %v1215
    %v1222 = vrot.slane %v1216, 3
    %v1223 = vrot.slane %v1217, 3
    %v1224 = vsel %vm671, %v1222, %v1223
    %v1225 = vrot.slane %v1218, 3
    %v1226 = vsel %vm671, %v1223, %v1225
    %v1230 = vadd.f32 %v1142, %v1224
    %v1231 = vadd.f32 %v1143, %v1226
    %v1232 = vadd.f32 %v1144, %v1225
    %s1233 = sld [smem:[#allocation7 + $0x9e]]
    %v1234 = vstv %s1233
    %v1235 = vmul.f32 %v68, %v1234
    %v1236 = vmul.f32 %v69, %v1234
    %v1237 = vmul.f32 %v70, %v1234
    %v1241 = vrot.slane %v1235, 4
    %v1242 = vrot.slane %v1236, 4
    %v1243 = vsel %vm976, %v1241, %v1242
    %v1244 = vrot.slane %v1237, 4
    %v1245 = vsel %vm976, %v1242, %v1244
    %v1248 = vadd.f32 %v1160, %v1243
    %v1249 = vadd.f32 %v1161, %v1245
    %s1250 = sld [smem:[#allocation7 + $0x9f]]
    %v1251 = vstv %s1250
    %v1252 = vmul.f32 %v68, %v1251
    %v1253 = vmul.f32 %v69, %v1251
    %v1254 = vmul.f32 %v70, %v1251
    %v1258 = vrot.slane %v1252, 4
    %v1259 = vrot.slane %v1253, 4
    %v1260 = vsel %vm976, %v1258, %v1259
    %v1261 = vrot.slane %v1254, 4
    %v1262 = vsel %vm976, %v1259, %v1261
    %v1265 = vadd.f32 %v1177, %v1260
    %v1266 = vadd.f32 %v1178, %v1262
    %s1267 = sld [smem:[#allocation7 + $0xa0]]
    %v1268 = vstv %s1267
    %v1269 = vmul.f32 %v59, %v1268
    %v1270 = vmul.f32 %v60, %v1268
    %v1271 = vmul.f32 %v61, %v1268
    %v1272 = vadd.f32 %v72, %v1269
    %v1273 = vadd.f32 %v72, %v1270
    %v1274 = vadd.f32 %v72, %v1271
    %s1275 = sld [smem:[#allocation7 + $0xa1]]
    %v1276 = vstv %s1275
    %v1277 = vmul.f32 %v59, %v1276
    %v1278 = vmul.f32 %v60, %v1276
    %v1279 = vmul.f32 %v61, %v1276
    %v1280 = vadd.f32 %v74, %v1277
    %v1281 = vadd.f32 %v74, %v1278
    %v1282 = vadd.f32 %v74, %v1279
    %s1283 = sld [smem:[#allocation7 + $0xa2]]
    %v1284 = vstv %s1283
    %v1285 = vmul.f32 %v59, %v1284
    %v1286 = vmul.f32 %v60, %v1284
    %v1287 = vmul.f32 %v61, %v1284
    %v1291 = vrot.slane %v1285, 1
    %v1292 = vrot.slane %v1286, 1
    %v1293 = vsel %vm159, %v1291, %v1292
    %v1294 = vrot.slane %v1287, 1
    %v1295 = vsel %vm159, %v1292, %v1294
    %v1299 = vadd.f32 %v1184, %v1293
    %v1300 = vadd.f32 %v1185, %v1295
    %v1301 = vadd.f32 %v1186, %v1294
    %s1302 = sld [smem:[#allocation7 + $0xa3]]
    %v1303 = vstv %s1302
    %v1304 = vmul.f32 %v59, %v1303
    %v1305 = vmul.f32 %v60, %v1303
    %v1306 = vmul.f32 %v61, %v1303
    %v1310 = vrot.slane %v1304, 1
    %v1311 = vrot.slane %v1305, 1
    %v1312 = vsel %vm159, %v1310, %v1311
    %v1313 = vrot.slane %v1306, 1
    %v1314 = vsel %vm159, %v1311, %v1313
    %v1318 = vadd.f32 %v1192, %v1312
    %v1319 = vadd.f32 %v1193, %v1314
    %v1320 = vadd.f32 %v1194, %v1313
    %s1321 = sld [smem:[#allocation7 + $0xa4]]
    %v1322 = vstv %s1321
    %v1323 = vmul.f32 %v59, %v1322
    %v1324 = vmul.f32 %v60, %v1322
    %v1325 = vmul.f32 %v61, %v1322
    %v1329 = vrot.slane %v1323, 4
    %v1330 = vrot.slane %v1324, 4
    %v1331 = vsel %vm976, %v1329, %v1330
    %v1332 = vrot.slane %v1325, 4
    %v1333 = vsel %vm976, %v1330, %v1332
    %v1337 = vadd.f32 %v1211, %v1331
    %v1338 = vadd.f32 %v1212, %v1333
    %v1339 = vadd.f32 %v1213, %v1332
    %s1340 = sld [smem:[#allocation7 + $0xa5]]
    %v1341 = vstv %s1340
    %v1342 = vmul.f32 %v59, %v1341
    %v1343 = vmul.f32 %v60, %v1341
    %v1344 = vmul.f32 %v61, %v1341
    %v1348 = vrot.slane %v1342, 4
    %v1349 = vrot.slane %v1343, 4
    %v1350 = vsel %vm976, %v1348, %v1349
    %v1351 = vrot.slane %v1344, 4
    %v1352 = vsel %vm976, %v1349, %v1351
    %v1356 = vadd.f32 %v1230, %v1350
    %v1357 = vadd.f32 %v1231, %v1352
    %v1358 = vadd.f32 %v1232, %v1351
    %s1359 = sld [smem:[#allocation7 + $0xa6]]
    %v1360 = vstv %s1359
    %v1361 = vmul.f32 %v59, %v1360
    %v1362 = vmul.f32 %v60, %v1360
    %v1363 = vmul.f32 %v61, %v1360
    %vm1367 = vcmask 1042432
    %v1368 = vrot.slane %v1361, 5
    %v1369 = vrot.slane %v1362, 5
    %v1370 = vsel %vm1367, %v1368, %v1369
    %v1371 = vrot.slane %v1363, 5
    %v1372 = vsel %vm1367, %v1369, %v1371
    %v1375 = vadd.f32 %v1248, %v1370
    %v1376 = vadd.f32 %v1249, %v1372
    %s1377 = sld [smem:[#allocation7 + $0xa7]]
    %v1378 = vstv %s1377
    %v1379 = vmul.f32 %v59, %v1378
    %v1380 = vmul.f32 %v60, %v1378
    %v1381 = vmul.f32 %v61, %v1378
    %v1385 = vrot.slane %v1379, 5
    %v1386 = vrot.slane %v1380, 5
    %v1387 = vsel %vm1367, %v1385, %v1386
    %v1388 = vrot.slane %v1381, 5
    %v1389 = vsel %vm1367, %v1386, %v1388
    %v1392 = vadd.f32 %v1265, %v1387
    %v1393 = vadd.f32 %v1266, %v1389
    %s1394 = sld [smem:[#allocation7 + $0xa8]]
    %v1395 = vstv %s1394
    %v1396 = vmul.f32 %v62, %v1395
    %v1397 = vmul.f32 %v63, %v1395
    %v1398 = vmul.f32 %v64, %v1395
    %v1399 = vadd.f32 %v1272, %v1396
    %v1400 = vadd.f32 %v1273, %v1397
    %v1401 = vadd.f32 %v1274, %v1398
    %s1402 = sld [smem:[#allocation7 + $0xa9]]
    %v1403 = vstv %s1402
    %v1404 = vmul.f32 %v62, %v1403
    %v1405 = vmul.f32 %v63, %v1403
    %v1406 = vmul.f32 %v64, %v1403
    %v1407 = vadd.f32 %v1280, %v1404
    %v1408 = vadd.f32 %v1281, %v1405
    %v1409 = vadd.f32 %v1282, %v1406
    %s1410 = sld [smem:[#allocation7 + $0xaa]]
    %v1411 = vstv %s1410
    %v1412 = vmul.f32 %v62, %v1411
    %v1413 = vmul.f32 %v63, %v1411
    %v1414 = vmul.f32 %v64, %v1411
    %v1418 = vrot.slane %v1412, 1
    %v1419 = vrot.slane %v1413, 1
    %v1420 = vsel %vm159, %v1418, %v1419
    %v1421 = vrot.slane %v1414, 1
    %v1422 = vsel %vm159, %v1419, %v1421
    %v1426 = vadd.f32 %v1299, %v1420
    %v1427 = vadd.f32 %v1300, %v1422
    %v1428 = vadd.f32 %v1301, %v1421
    %s1429 = sld [smem:[#allocation7 + $0xab]]
    %v1430 = vstv %s1429
    %v1431 = vmul.f32 %v62, %v1430
    %v1432 = vmul.f32 %v63, %v1430
    %v1433 = vmul.f32 %v64, %v1430
    %v1437 = vrot.slane %v1431, 1
    %v1438 = vrot.slane %v1432, 1
    %v1439 = vsel %vm159, %v1437, %v1438
    %v1440 = vrot.slane %v1433, 1
    %v1441 = vsel %vm159, %v1438, %v1440
    %v1445 = vadd.f32 %v1318, %v1439
    %v1446 = vadd.f32 %v1319, %v1441
    %v1447 = vadd.f32 %v1320, %v1440
    %s1448 = sld [smem:[#allocation7 + $0xac]]
    %v1449 = vstv %s1448
    %v1450 = vmul.f32 %v62, %v1449
    %v1451 = vmul.f32 %v63, %v1449
    %v1452 = vmul.f32 %v64, %v1449
    %v1456 = vrot.slane %v1450, 4
    %v1457 = vrot.slane %v1451, 4
    %v1458 = vsel %vm976, %v1456, %v1457
    %v1459 = vrot.slane %v1452, 4
    %v1460 = vsel %vm976, %v1457, %v1459
    %v1464 = vadd.f32 %v1337, %v1458
    %v1465 = vadd.f32 %v1338, %v1460
    %v1466 = vadd.f32 %v1339, %v1459
    %s1467 = sld [smem:[#allocation7 + $0xad]]
    %v1468 = vstv %s1467
    %v1469 = vmul.f32 %v62, %v1468
    %v1470 = vmul.f32 %v63, %v1468
    %v1471 = vmul.f32 %v64, %v1468
    %v1475 = vrot.slane %v1469, 4
    %v1476 = vrot.slane %v1470, 4
    %v1477 = vsel %vm976, %v1475, %v1476
    %v1478 = vrot.slane %v1471, 4
    %v1479 = vsel %vm976, %v1476, %v1478
    %v1483 = vadd.f32 %v1356, %v1477
    %v1484 = vadd.f32 %v1357, %v1479
    %v1485 = vadd.f32 %v1358, %v1478
    %s1486 = sld [smem:[#allocation7 + $0xae]]
    %v1487 = vstv %s1486
    %v1488 = vmul.f32 %v62, %v1487
    %v1489 = vmul.f32 %v63, %v1487
    %v1490 = vmul.f32 %v64, %v1487
    %v1494 = vrot.slane %v1488, 5
    %v1495 = vrot.slane %v1489, 5
    %v1496 = vsel %vm1367, %v1494, %v1495
    %v1497 = vrot.slane %v1490, 5
    %v1498 = vsel %vm1367, %v1495, %v1497
    %v1501 = vadd.f32 %v1375, %v1496
    %v1502 = vadd.f32 %v1376, %v1498
    %s1503 = sld [smem:[#allocation7 + $0xaf]]
    %v1504 = vstv %s1503
    %v1505 = vmul.f32 %v62, %v1504
    %v1506 = vmul.f32 %v63, %v1504
    %v1507 = vmul.f32 %v64, %v1504
    %v1511 = vrot.slane %v1505, 5
    %v1512 = vrot.slane %v1506, 5
    %v1513 = vsel %vm1367, %v1511, %v1512
    %v1514 = vrot.slane %v1507, 5
    %v1515 = vsel %vm1367, %v1512, %v1514
    %v1518 = vadd.f32 %v1392, %v1513
    %v1519 = vadd.f32 %v1393, %v1515
    %s1520 = sld [smem:[#allocation7 + $0xb0]]
    %v1521 = vstv %s1520
    %v1522 = vmul.f32 %v65, %v1521
    %v1523 = vmul.f32 %v66, %v1521
    %v1524 = vmul.f32 %v67, %v1521
    %v1525 = vadd.f32 %v1399, %v1522
    %v1526 = vadd.f32 %v1400, %v1523
    %v1527 = vadd.f32 %v1401, %v1524
    %s1528 = sld [smem:[#allocation7 + $0xb1]]
    %v1529 = vstv %s1528
    %v1530 = vmul.f32 %v65, %v1529
    %v1531 = vmul.f32 %v66, %v1529
    %v1532 = vmul.f32 %v67, %v1529
    %v1533 = vadd.f32 %v1407, %v1530
    %v1534 = vadd.f32 %v1408, %v1531
    %v1535 = vadd.f32 %v1409, %v1532
    %s1536 = sld [smem:[#allocation7 + $0xb2]]
    %v1537 = vstv %s1536
    %v1538 = vmul.f32 %v65, %v1537
    %v1539 = vmul.f32 %v66, %v1537
    %v1540 = vmul.f32 %v67, %v1537
    %v1544 = vrot.slane %v1538, 1
    %v1545 = vrot.slane %v1539, 1
    %v1546 = vsel %vm159, %v1544, %v1545
    %v1547 = vrot.slane %v1540, 1
    %v1548 = vsel %vm159, %v1545, %v1547
    %v1552 = vadd.f32 %v1426, %v1546
    %v1553 = vadd.f32 %v1427, %v1548
    %v1554 = vadd.f32 %v1428, %v1547
    %s1555 = sld [smem:[#allocation7 + $0xb3]]
    %v1556 = vstv %s1555
    %v1557 = vmul.f32 %v65, %v1556
    %v1558 = vmul.f32 %v66, %v1556
    %v1559 = vmul.f32 %v67, %v1556
    %v1563 = vrot.slane %v1557, 1
    %v1564 = vrot.slane %v1558, 1
    %v1565 = vsel %vm159, %v1563, %v1564
    %v1566 = vrot.slane %v1559, 1
    %v1567 = vsel %vm159, %v1564, %v1566
    %v1571 = vadd.f32 %v1445, %v1565
    %v1572 = vadd.f32 %v1446, %v1567
    %v1573 = vadd.f32 %v1447, %v1566
    %s1574 = sld [smem:[#allocation7 + $0xb4]]
    %v1575 = vstv %s1574
    %v1576 = vmul.f32 %v65, %v1575
    %v1577 = vmul.f32 %v66, %v1575
    %v1578 = vmul.f32 %v67, %v1575
    %v1582 = vrot.slane %v1576, 4
    %v1583 = vrot.slane %v1577, 4
    %v1584 = vsel %vm976, %v1582, %v1583
    %v1585 = vrot.slane %v1578, 4
    %v1586 = vsel %vm976, %v1583, %v1585
    %v1590 = vadd.f32 %v1464, %v1584
    %v1591 = vadd.f32 %v1465, %v1586
    %v1592 = vadd.f32 %v1466, %v1585
    %s1593 = sld [smem:[#allocation7 + $0xb5]]
    %v1594 = vstv %s1593
    %v1595 = vmul.f32 %v65, %v1594
    %v1596 = vmul.f32 %v66, %v1594
    %v1597 = vmul.f32 %v67, %v1594
    %v1601 = vrot.slane %v1595, 4
    %v1602 = vrot.slane %v1596, 4
    %v1603 = vsel %vm976, %v1601, %v1602
    %v1604 = vrot.slane %v1597, 4
    %v1605 = vsel %vm976, %v1602, %v1604
    %v1609 = vadd.f32 %v1483, %v1603
    %v1610 = vadd.f32 %v1484, %v1605
    %v1611 = vadd.f32 %v1485, %v1604
    %s1612 = sld [smem:[#allocation7 + $0xb6]]
    %v1613 = vstv %s1612
    %v1614 = vmul.f32 %v65, %v1613
    %v1615 = vmul.f32 %v66, %v1613
    %v1616 = vmul.f32 %v67, %v1613
    %v1620 = vrot.slane %v1614, 5
    %v1621 = vrot.slane %v1615, 5
    %v1622 = vsel %vm1367, %v1620, %v1621
    %v1623 = vrot.slane %v1616, 5
    %v1624 = vsel %vm1367, %v1621, %v1623
    %v1627 = vadd.f32 %v1501, %v1622
    %v1628 = vadd.f32 %v1502, %v1624
    %s1629 = sld [smem:[#allocation7 + $0xb7]]
    %v1630 = vstv %s1629
    %v1631 = vmul.f32 %v65, %v1630
    %v1632 = vmul.f32 %v66, %v1630
    %v1633 = vmul.f32 %v67, %v1630
    %v1637 = vrot.slane %v1631, 5
    %v1638 = vrot.slane %v1632, 5
    %v1639 = vsel %vm1367, %v1637, %v1638
    %v1640 = vrot.slane %v1633, 5
    %v1641 = vsel %vm1367, %v1638, %v1640
    %v1644 = vadd.f32 %v1518, %v1639
    %v1645 = vadd.f32 %v1519, %v1641
    %s1646 = sld [smem:[#allocation7 + $0xb8]]
    %v1647 = vstv %s1646
    %v1648 = vmul.f32 %v68, %v1647
    %v1649 = vmul.f32 %v69, %v1647
    %v1650 = vmul.f32 %v70, %v1647
    %v1651 = vadd.f32 %v1525, %v1648
    %v1652 = vadd.f32 %v1526, %v1649
    %v1653 = vadd.f32 %v1527, %v1650
    %s1654 = sld [smem:[#allocation7 + $0xb9]]
    %v1655 = vstv %s1654
    %v1656 = vmul.f32 %v68, %v1655
    %v1657 = vmul.f32 %v69, %v1655
    %v1658 = vmul.f32 %v70, %v1655
    %v1659 = vadd.f32 %v1533, %v1656
    %v1660 = vadd.f32 %v1534, %v1657
    %v1661 = vadd.f32 %v1535, %v1658
    %s1662 = sld [smem:[#allocation7 + $0xba]]
    %v1663 = vstv %s1662
    %v1664 = vmul.f32 %v68, %v1663
    %v1665 = vmul.f32 %v69, %v1663
    %v1666 = vmul.f32 %v70, %v1663
    %v1670 = vrot.slane %v1664, 1
    %v1671 = vrot.slane %v1665, 1
    %v1672 = vsel %vm159, %v1670, %v1671
    %v1673 = vrot.slane %v1666, 1
    %v1674 = vsel %vm159, %v1671, %v1673
    %v1678 = vadd.f32 %v1552, %v1672
    %v1679 = vadd.f32 %v1553, %v1674
    %v1680 = vadd.f32 %v1554, %v1673
    %s1681 = sld [smem:[#allocation7 + $0xbb]]
    %v1682 = vstv %s1681
    %v1683 = vmul.f32 %v68, %v1682
    %v1684 = vmul.f32 %v69, %v1682
    %v1685 = vmul.f32 %v70, %v1682
    %v1689 = vrot.slane %v1683, 1
    %v1690 = vrot.slane %v1684, 1
    %v1691 = vsel %vm159, %v1689, %v1690
    %v1692 = vrot.slane %v1685, 1
    %v1693 = vsel %vm159, %v1690, %v1692
    %v1697 = vadd.f32 %v1571, %v1691
    %v1698 = vadd.f32 %v1572, %v1693
    %v1699 = vadd.f32 %v1573, %v1692
    %s1700 = sld [smem:[#allocation7 + $0xbc]]
    %v1701 = vstv %s1700
    %v1702 = vmul.f32 %v68, %v1701
    %v1703 = vmul.f32 %v69, %v1701
    %v1704 = vmul.f32 %v70, %v1701
    %v1708 = vrot.slane %v1702, 4
    %v1709 = vrot.slane %v1703, 4
    %v1710 = vsel %vm976, %v1708, %v1709
    %v1711 = vrot.slane %v1704, 4
    %v1712 = vsel %vm976, %v1709, %v1711
    %v1716 = vadd.f32 %v1590, %v1710
    %v1717 = vadd.f32 %v1591, %v1712
    %v1718 = vadd.f32 %v1592, %v1711
    %s1719 = sld [smem:[#allocation7 + $0xbd]]
    %v1720 = vstv %s1719
    %v1721 = vmul.f32 %v68, %v1720
    %v1722 = vmul.f32 %v69, %v1720
    %v1723 = vmul.f32 %v70, %v1720
    %v1727 = vrot.slane %v1721, 4
    %v1728 = vrot.slane %v1722, 4
    %v1729 = vsel %vm976, %v1727, %v1728
    %v1730 = vrot.slane %v1723, 4
    %v1731 = vsel %vm976, %v1728, %v1730
    %v1735 = vadd.f32 %v1609, %v1729
    %v1736 = vadd.f32 %v1610, %v1731
    %v1737 = vadd.f32 %v1611, %v1730
    %s1738 = sld [smem:[#allocation7 + $0xbe]]
    %v1739 = vstv %s1738
    %v1740 = vmul.f32 %v68, %v1739
    %v1741 = vmul.f32 %v69, %v1739
    %v1742 = vmul.f32 %v70, %v1739
    %v1746 = vrot.slane %v1740, 5
    %v1747 = vrot.slane %v1741, 5
    %v1748 = vsel %vm1367, %v1746, %v1747
    %v1749 = vrot.slane %v1742, 5
    %v1750 = vsel %vm1367, %v1747, %v1749
    %v1753 = vadd.f32 %v1627, %v1748
    %v1754 = vadd.f32 %v1628, %v1750
    %s1755 = sld [smem:[#allocation7 + $0xbf]]
    %v1756 = vstv %s1755
    %v1757 = vmul.f32 %v68, %v1756
    %v1758 = vmul.f32 %v69, %v1756
    %v1759 = vmul.f32 %v70, %v1756
    %v1763 = vrot.slane %v1757, 5
    %v1764 = vrot.slane %v1758, 5
    %v1765 = vsel %vm1367, %v1763, %v1764
    %v1766 = vrot.slane %v1759, 5
    %v1767 = vsel %vm1367, %v1764, %v1766
    %v1770 = vadd.f32 %v1644, %v1765
    %v1771 = vadd.f32 %v1645, %v1767
    %s1772 = sld [smem:[#allocation7 + $0xc0]]
    %v1773 = vstv %s1772
    %v1774 = vmul.f32 %v59, %v1773
    %v1775 = vmul.f32 %v60, %v1773
    %v1776 = vmul.f32 %v61, %v1773
    %v1780 = vrot.slane %v1774, 1
    %v1781 = vrot.slane %v1775, 1
    %v1782 = vsel %vm159, %v1780, %v1781
    %v1783 = vrot.slane %v1776, 1
    %v1784 = vsel %vm159, %v1781, %v1783
    %v1788 = vadd.f32 %v1651, %v1782
    %v1789 = vadd.f32 %v1652, %v1784
    %v1790 = vadd.f32 %v1653, %v1783
    %s1791 = sld [smem:[#allocation7 + $0xc1]]
    %v1792 = vstv %s1791
    %v1793 = vmul.f32 %v59, %v1792
    %v1794 = vmul.f32 %v60, %v1792
    %v1795 = vmul.f32 %v61, %v1792
    %v1799 = vrot.slane %v1793, 1
    %v1800 = vrot.slane %v1794, 1
    %v1801 = vsel %vm159, %v1799, %v1800
    %v1802 = vrot.slane %v1795, 1
    %v1803 = vsel %vm159, %v1800, %v1802
    %v1807 = vadd.f32 %v1659, %v1801
    %v1808 = vadd.f32 %v1660, %v1803
    %v1809 = vadd.f32 %v1661, %v1802
    %s1810 = sld [smem:[#allocation7 + $0xc2]]
    %v1811 = vstv %s1810
    %v1812 = vmul.f32 %v59, %v1811
    %v1813 = vmul.f32 %v60, %v1811
    %v1814 = vmul.f32 %v61, %v1811
    %v1818 = vrot.slane %v1812, 2
    %v1819 = vrot.slane %v1813, 2
    %v1820 = vsel %vm382, %v1818, %v1819
    %v1821 = vrot.slane %v1814, 2
    %v1822 = vsel %vm382, %v1819, %v1821
    %v1826 = vadd.f32 %v1678, %v1820
    %v1827 = vadd.f32 %v1679, %v1822
    %v1828 = vadd.f32 %v1680, %v1821
    %s1829 = sld [smem:[#allocation7 + $0xc3]]
    %v1830 = vstv %s1829
    %v1831 = vmul.f32 %v59, %v1830
    %v1832 = vmul.f32 %v60, %v1830
    %v1833 = vmul.f32 %v61, %v1830
    %v1837 = vrot.slane %v1831, 2
    %v1838 = vrot.slane %v1832, 2
    %v1839 = vsel %vm382, %v1837, %v1838
    %v1840 = vrot.slane %v1833, 2
    %v1841 = vsel %vm382, %v1838, %v1840
    %v1845 = vadd.f32 %v1697, %v1839
    %v1846 = vadd.f32 %v1698, %v1841
    %v1847 = vadd.f32 %v1699, %v1840
    %s1848 = sld [smem:[#allocation7 + $0xc4]]
    %v1849 = vstv %s1848
    %v1850 = vmul.f32 %v59, %v1849
    %v1851 = vmul.f32 %v60, %v1849
    %v1852 = vmul.f32 %v61, %v1849
    %v1856 = vrot.slane %v1850, 5
    %v1857 = vrot.slane %v1851, 5
    %v1858 = vsel %vm1367, %v1856, %v1857
    %v1859 = vrot.slane %v1852, 5
    %v1860 = vsel %vm1367, %v1857, %v1859
    %v1864 = vadd.f32 %v1716, %v1858
    %v1865 = vadd.f32 %v1717, %v1860
    %v1866 = vadd.f32 %v1718, %v1859
    %s1867 = sld [smem:[#allocation7 + $0xc5]]
    %v1868 = vstv %s1867
    %v1869 = vmul.f32 %v59, %v1868
    %v1870 = vmul.f32 %v60, %v1868
    %v1871 = vmul.f32 %v61, %v1868
    %v1875 = vrot.slane %v1869, 5
    %v1876 = vrot.slane %v1870, 5
    %v1877 = vsel %vm1367, %v1875, %v1876
    %v1878 = vrot.slane %v1871, 5
    %v1879 = vsel %vm1367, %v1876, %v1878
    %v1883 = vadd.f32 %v1735, %v1877
    %v1884 = vadd.f32 %v1736, %v1879
    %v1885 = vadd.f32 %v1737, %v1878
    %s1886 = sld [smem:[#allocation7 + $0xc6]]
    %v1887 = vstv %s1886
    %v1888 = vmul.f32 %v59, %v1887
    %v1889 = vmul.f32 %v60, %v1887
    %v1890 = vmul.f32 %v61, %v1887
    %vm1894 = vcmask 1041408
    %v1895 = vrot.slane %v1888, 6
    %v1896 = vrot.slane %v1889, 6
    %v1897 = vsel %vm1894, %v1895, %v1896
    %v1898 = vrot.slane %v1890, 6
    %v1899 = vsel %vm1894, %v1896, %v1898
    %v1902 = vadd.f32 %v1753, %v1897
    %v1903 = vadd.f32 %v1754, %v1899
    %s1904 = sld [smem:[#allocation7 + $0xc7]]
    %v1905 = vstv %s1904
    %v1906 = vmul.f32 %v59, %v1905
    %v1907 = vmul.f32 %v60, %v1905
    %v1908 = vmul.f32 %v61, %v1905
    %v1912 = vrot.slane %v1906, 6
    %v1913 = vrot.slane %v1907, 6
    %v1914 = vsel %vm1894, %v1912, %v1913
    %v1915 = vrot.slane %v1908, 6
    %v1916 = vsel %vm1894, %v1913, %v1915
    %v1919 = vadd.f32 %v1770, %v1914
    %v1920 = vadd.f32 %v1771, %v1916
    %s1921 = sld [smem:[#allocation7 + $0xc8]]
    %v1922 = vstv %s1921
    %v1923 = vmul.f32 %v62, %v1922
    %v1924 = vmul.f32 %v63, %v1922
    %v1925 = vmul.f32 %v64, %v1922
    %v1929 = vrot.slane %v1923, 1
    %v1930 = vrot.slane %v1924, 1
    %v1931 = vsel %vm159, %v1929, %v1930
    %v1932 = vrot.slane %v1925, 1
    %v1933 = vsel %vm159, %v1930, %v1932
    %v1937 = vadd.f32 %v1788, %v1931
    %v1938 = vadd.f32 %v1789, %v1933
    %v1939 = vadd.f32 %v1790, %v1932
    %s1940 = sld [smem:[#allocation7 + $0xc9]]
    %v1941 = vstv %s1940
    %v1942 = vmul.f32 %v62, %v1941
    %v1943 = vmul.f32 %v63, %v1941
    %v1944 = vmul.f32 %v64, %v1941
    %v1948 = vrot.slane %v1942, 1
    %v1949 = vrot.slane %v1943, 1
    %v1950 = vsel %vm159, %v1948, %v1949
    %v1951 = vrot.slane %v1944, 1
    %v1952 = vsel %vm159, %v1949, %v1951
    %v1956 = vadd.f32 %v1807, %v1950
    %v1957 = vadd.f32 %v1808, %v1952
    %v1958 = vadd.f32 %v1809, %v1951
    %s1959 = sld [smem:[#allocation7 + $0xca]]
    %v1960 = vstv %s1959
    %v1961 = vmul.f32 %v62, %v1960
    %v1962 = vmul.f32 %v63, %v1960
    %v1963 = vmul.f32 %v64, %v1960
    %v1967 = vrot.slane %v1961, 2
    %v1968 = vrot.slane %v1962, 2
    %v1969 = vsel %vm382, %v1967, %v1968
    %v1970 = vrot.slane %v1963, 2
    %v1971 = vsel %vm382, %v1968, %v1970
    %v1975 = vadd.f32 %v1826, %v1969
    %v1976 = vadd.f32 %v1827, %v1971
    %v1977 = vadd.f32 %v1828, %v1970
    %s1978 = sld [smem:[#allocation7 + $0xcb]]
    %v1979 = vstv %s1978
    %v1980 = vmul.f32 %v62, %v1979
    %v1981 = vmul.f32 %v63, %v1979
    %v1982 = vmul.f32 %v64, %v1979
    %v1986 = vrot.slane %v1980, 2
    %v1987 = vrot.slane %v1981, 2
    %v1988 = vsel %vm382, %v1986, %v1987
    %v1989 = vrot.slane %v1982, 2
    %v1990 = vsel %vm382, %v1987, %v1989
    %v1994 = vadd.f32 %v1845, %v1988
    %v1995 = vadd.f32 %v1846, %v1990
    %v1996 = vadd.f32 %v1847, %v1989
    %s1997 = sld [smem:[#allocation7 + $0xcc]]
    %v1998 = vstv %s1997
    %v1999 = vmul.f32 %v62, %v1998
    %v2000 = vmul.f32 %v63, %v1998
    %v2001 = vmul.f32 %v64, %v1998
    %v2005 = vrot.slane %v1999, 5
    %v2006 = vrot.slane %v2000, 5
    %v2007 = vsel %vm1367, %v2005, %v2006
    %v2008 = vrot.slane %v2001, 5
    %v2009 = vsel %vm1367, %v2006, %v2008
    %v2013 = vadd.f32 %v1864, %v2007
    %v2014 = vadd.f32 %v1865, %v2009
    %v2015 = vadd.f32 %v1866, %v2008
    %s2016 = sld [smem:[#allocation7 + $0xcd]]
    %v2017 = vstv %s2016
    %v2018 = vmul.f32 %v62, %v2017
    %v2019 = vmul.f32 %v63, %v2017
    %v2020 = vmul.f32 %v64, %v2017
    %v2024 = vrot.slane %v2018, 5
    %v2025 = vrot.slane %v2019, 5
    %v2026 = vsel %vm1367, %v2024, %v2025
    %v2027 = vrot.slane %v2020, 5
    %v2028 = vsel %vm1367, %v2025, %v2027
    %v2032 = vadd.f32 %v1883, %v2026
    %v2033 = vadd.f32 %v1884, %v2028
    %v2034 = vadd.f32 %v1885, %v2027
    %s2035 = sld [smem:[#allocation7 + $0xce]]
    %v2036 = vstv %s2035
    %v2037 = vmul.f32 %v62, %v2036
    %v2038 = vmul.f32 %v63, %v2036
    %v2039 = vmul.f32 %v64, %v2036
    %v2043 = vrot.slane %v2037, 6
    %v2044 = vrot.slane %v2038, 6
    %v2045 = vsel %vm1894, %v2043, %v2044
    %v2046 = vrot.slane %v2039, 6
    %v2047 = vsel %vm1894, %v2044, %v2046
    %v2050 = vadd.f32 %v1902, %v2045
    %v2051 = vadd.f32 %v1903, %v2047
    %s2052 = sld [smem:[#allocation7 + $0xcf]]
    %v2053 = vstv %s2052
    %v2054 = vmul.f32 %v62, %v2053
    %v2055 = vmul.f32 %v63, %v2053
    %v2056 = vmul.f32 %v64, %v2053
    %v2060 = vrot.slane %v2054, 6
    %v2061 = vrot.slane %v2055, 6
    %v2062 = vsel %vm1894, %v2060, %v2061
    %v2063 = vrot.slane %v2056, 6
    %v2064 = vsel %vm1894, %v2061, %v2063
    %v2067 = vadd.f32 %v1919, %v2062
    %v2068 = vadd.f32 %v1920, %v2064
    %s2069 = sld [smem:[#allocation7 + $0xd0]]
    %v2070 = vstv %s2069
    %v2071 = vmul.f32 %v65, %v2070
    %v2072 = vmul.f32 %v66, %v2070
    %v2073 = vmul.f32 %v67, %v2070
    %v2077 = vrot.slane %v2071, 1
    %v2078 = vrot.slane %v2072, 1
    %v2079 = vsel %vm159, %v2077, %v2078
    %v2080 = vrot.slane %v2073, 1
    %v2081 = vsel %vm159, %v2078, %v2080
    %v2085 = vadd.f32 %v1937, %v2079
    %v2086 = vadd.f32 %v1938, %v2081
    %v2087 = vadd.f32 %v1939, %v2080
    %s2088 = sld [smem:[#allocation7 + $0xd1]]
    %v2089 = vstv %s2088
    %v2090 = vmul.f32 %v65, %v2089
    %v2091 = vmul.f32 %v66, %v2089
    %v2092 = vmul.f32 %v67, %v2089
    %v2096 = vrot.slane %v2090, 1
    %v2097 = vrot.slane %v2091, 1
    %v2098 = vsel %vm159, %v2096, %v2097
    %v2099 = vrot.slane %v2092, 1
    %v2100 = vsel %vm159, %v2097, %v2099
    %v2104 = vadd.f32 %v1956, %v2098
    %v2105 = vadd.f32 %v1957, %v2100
    %v2106 = vadd.f32 %v1958, %v2099
    %s2107 = sld [smem:[#allocation7 + $0xd2]]
    %v2108 = vstv %s2107
    %v2109 = vmul.f32 %v65, %v2108
    %v2110 = vmul.f32 %v66, %v2108
    %v2111 = vmul.f32 %v67, %v2108
    %v2115 = vrot.slane %v2109, 2
    %v2116 = vrot.slane %v2110, 2
    %v2117 = vsel %vm382, %v2115, %v2116
    %v2118 = vrot.slane %v2111, 2
    %v2119 = vsel %vm382, %v2116, %v2118
    %v2123 = vadd.f32 %v1975, %v2117
    %v2124 = vadd.f32 %v1976, %v2119
    %v2125 = vadd.f32 %v1977, %v2118
    %s2126 = sld [smem:[#allocation7 + $0xd3]]
    %v2127 = vstv %s2126
    %v2128 = vmul.f32 %v65, %v2127
    %v2129 = vmul.f32 %v66, %v2127
    %v2130 = vmul.f32 %v67, %v2127
    %v2134 = vrot.slane %v2128, 2
    %v2135 = vrot.slane %v2129, 2
    %v2136 = vsel %vm382, %v2134, %v2135
    %v2137 = vrot.slane %v2130, 2
    %v2138 = vsel %vm382, %v2135, %v2137
    %v2142 = vadd.f32 %v1994, %v2136
    %v2143 = vadd.f32 %v1995, %v2138
    %v2144 = vadd.f32 %v1996, %v2137
    %s2145 = sld [smem:[#allocation7 + $0xd4]]
    %v2146 = vstv %s2145
    %v2147 = vmul.f32 %v65, %v2146
    %v2148 = vmul.f32 %v66, %v2146
    %v2149 = vmul.f32 %v67, %v2146
    %v2153 = vrot.slane %v2147, 5
    %v2154 = vrot.slane %v2148, 5
    %v2155 = vsel %vm1367, %v2153, %v2154
    %v2156 = vrot.slane %v2149, 5
    %v2157 = vsel %vm1367, %v2154, %v2156
    %v2161 = vadd.f32 %v2013, %v2155
    %v2162 = vadd.f32 %v2014, %v2157
    %v2163 = vadd.f32 %v2015, %v2156
    %s2164 = sld [smem:[#allocation7 + $0xd5]]
    %v2165 = vstv %s2164
    %v2166 = vmul.f32 %v65, %v2165
    %v2167 = vmul.f32 %v66, %v2165
    %v2168 = vmul.f32 %v67, %v2165
    %v2172 = vrot.slane %v2166, 5
    %v2173 = vrot.slane %v2167, 5
    %v2174 = vsel %vm1367, %v2172, %v2173
    %v2175 = vrot.slane %v2168, 5
    %v2176 = vsel %vm1367, %v2173, %v2175
    %v2180 = vadd.f32 %v2032, %v2174
    %v2181 = vadd.f32 %v2033, %v2176
    %v2182 = vadd.f32 %v2034, %v2175
    %s2183 = sld [smem:[#allocation7 + $0xd6]]
    %v2184 = vstv %s2183
    %v2185 = vmul.f32 %v65, %v2184
    %v2186 = vmul.f32 %v66, %v2184
    %v2187 = vmul.f32 %v67, %v2184
    %v2191 = vrot.slane %v2185, 6
    %v2192 = vrot.slane %v2186, 6
    %v2193 = vsel %vm1894, %v2191, %v2192
    %v2194 = vrot.slane %v2187, 6
    %v2195 = vsel %vm1894, %v2192, %v2194
    %v2198 = vadd.f32 %v2050, %v2193
    %v2199 = vadd.f32 %v2051, %v2195
    %s2200 = sld [smem:[#allocation7 + $0xd7]]
    %v2201 = vstv %s2200
    %v2202 = vmul.f32 %v65, %v2201
    %v2203 = vmul.f32 %v66, %v2201
    %v2204 = vmul.f32 %v67, %v2201
    %v2208 = vrot.slane %v2202, 6
    %v2209 = vrot.slane %v2203, 6
    %v2210 = vsel %vm1894, %v2208, %v2209
    %v2211 = vrot.slane %v2204, 6
    %v2212 = vsel %vm1894, %v2209, %v2211
    %v2215 = vadd.f32 %v2067, %v2210
    %v2216 = vadd.f32 %v2068, %v2212
    %s2217 = sld [smem:[#allocation7 + $0xd8]]
    %v2218 = vstv %s2217
    %v2219 = vmul.f32 %v68, %v2218
    %v2220 = vmul.f32 %v69, %v2218
    %v2221 = vmul.f32 %v70, %v2218
    %v2225 = vrot.slane %v2219, 1
    %v2226 = vrot.slane %v2220, 1
    %v2227 = vsel %vm159, %v2225, %v2226
    %v2228 = vrot.slane %v2221, 1
    %v2229 = vsel %vm159, %v2226, %v2228
    %v2233 = vadd.f32 %v2085, %v2227
    %v2234 = vadd.f32 %v2086, %v2229
    %v2235 = vadd.f32 %v2087, %v2228
    %s2236 = sld [smem:[#allocation7 + $0xd9]]
    %v2237 = vstv %s2236
    %v2238 = vmul.f32 %v68, %v2237
    %v2239 = vmul.f32 %v69, %v2237
    %v2240 = vmul.f32 %v70, %v2237
    %v2244 = vrot.slane %v2238, 1
    %v2245 = vrot.slane %v2239, 1
    %v2246 = vsel %vm159, %v2244, %v2245
    %v2247 = vrot.slane %v2240, 1
    %v2248 = vsel %vm159, %v2245, %v2247
    %v2252 = vadd.f32 %v2104, %v2246
    %v2253 = vadd.f32 %v2105, %v2248
    %v2254 = vadd.f32 %v2106, %v2247
    %s2255 = sld [smem:[#allocation7 + $0xda]]
    %v2256 = vstv %s2255
    %v2257 = vmul.f32 %v68, %v2256
    %v2258 = vmul.f32 %v69, %v2256
    %v2259 = vmul.f32 %v70, %v2256
    %v2263 = vrot.slane %v2257, 2
    %v2264 = vrot.slane %v2258, 2
    %v2265 = vsel %vm382, %v2263, %v2264
    %v2266 = vrot.slane %v2259, 2
    %v2267 = vsel %vm382, %v2264, %v2266
    %v2271 = vadd.f32 %v2123, %v2265
    %v2272 = vadd.f32 %v2124, %v2267
    %v2273 = vadd.f32 %v2125, %v2266
    %s2274 = sld [smem:[#allocation7 + $0xdb]]
    %v2275 = vstv %s2274
    %v2276 = vmul.f32 %v68, %v2275
    %v2277 = vmul.f32 %v69, %v2275
    %v2278 = vmul.f32 %v70, %v2275
    %v2282 = vrot.slane %v2276, 2
    %v2283 = vrot.slane %v2277, 2
    %v2284 = vsel %vm382, %v2282, %v2283
    %v2285 = vrot.slane %v2278, 2
    %v2286 = vsel %vm382, %v2283, %v2285
    %v2290 = vadd.f32 %v2142, %v2284
    %v2291 = vadd.f32 %v2143, %v2286
    %v2292 = vadd.f32 %v2144, %v2285
    %s2293 = sld [smem:[#allocation7 + $0xdc]]
    %v2294 = vstv %s2293
    %v2295 = vmul.f32 %v68, %v2294
    %v2296 = vmul.f32 %v69, %v2294
    %v2297 = vmul.f32 %v70, %v2294
    %v2301 = vrot.slane %v2295, 5
    %v2302 = vrot.slane %v2296, 5
    %v2303 = vsel %vm1367, %v2301, %v2302
    %v2304 = vrot.slane %v2297, 5
    %v2305 = vsel %vm1367, %v2302, %v2304
    %v2309 = vadd.f32 %v2161, %v2303
    %v2310 = vadd.f32 %v2162, %v2305
    %v2311 = vadd.f32 %v2163, %v2304
    %s2312 = sld [smem:[#allocation7 + $0xdd]]
    %v2313 = vstv %s2312
    %v2314 = vmul.f32 %v68, %v2313
    %v2315 = vmul.f32 %v69, %v2313
    %v2316 = vmul.f32 %v70, %v2313
    %v2320 = vrot.slane %v2314, 5
    %v2321 = vrot.slane %v2315, 5
    %v2322 = vsel %vm1367, %v2320, %v2321
    %v2323 = vrot.slane %v2316, 5
    %v2324 = vsel %vm1367, %v2321, %v2323
    %v2328 = vadd.f32 %v2180, %v2322
    %v2329 = vadd.f32 %v2181, %v2324
    %v2330 = vadd.f32 %v2182, %v2323
    %s2331 = sld [smem:[#allocation7 + $0xde]]
    %v2332 = vstv %s2331
    %v2333 = vmul.f32 %v68, %v2332
    %v2334 = vmul.f32 %v69, %v2332
    %v2335 = vmul.f32 %v70, %v2332
    %v2339 = vrot.slane %v2333, 6
    %v2340 = vrot.slane %v2334, 6
    %v2341 = vsel %vm1894, %v2339, %v2340
    %v2342 = vrot.slane %v2335, 6
    %v2343 = vsel %vm1894, %v2340, %v2342
    %v2346 = vadd.f32 %v2198, %v2341
    %v2347 = vadd.f32 %v2199, %v2343
    %s2348 = sld [smem:[#allocation7 + $0xdf]]
    %v2349 = vstv %s2348
    %v2350 = vmul.f32 %v68, %v2349
    %v2351 = vmul.f32 %v69, %v2349
    %v2352 = vmul.f32 %v70, %v2349
    %v2356 = vrot.slane %v2350, 6
    %v2357 = vrot.slane %v2351, 6
    %v2358 = vsel %vm1894, %v2356, %v2357
    %v2359 = vrot.slane %v2352, 6
    %v2360 = vsel %vm1894, %v2357, %v2359
    %v2363 = vadd.f32 %v2215, %v2358
    %v2364 = vadd.f32 %v2216, %v2360
    %2365 = vst [vmem:[#allocation9 - $0x5] sm:$0xe0] %v2233
    %2366 = vst [vmem:[#allocation9 + $0x3] sm:$0xff] %v2234
    %2367 = vst [vmem:[#allocation9 + $0xb] sm:$0x1f] %v2235
    %s2368 = sadd.s32 0, 16
    %s2369 = scalar_lea.vmem [#allocation9], %s2368
    %2370 = vst [vmem:[%s2369 - $0x5] sm:$0xe0] %v2252
    %2371 = vst [vmem:[%s2369 + $0x3] sm:$0xff] %v2253
    %2372 = vst [vmem:[%s2369 + $0xb] sm:$0x1f] %v2254
    %s2373 = sadd.s32 0, 32
    %s2374 = scalar_lea.vmem [#allocation9], %s2373
    %2375 = vst [vmem:[%s2374 - $0x4] sm:$0xf0] %v2271
    %2376 = vst [vmem:[%s2374 + $0x4] sm:$0xff] %v2272
    %2377 = vst [vmem:[%s2374 + $0xc] sm:$0xf] %v2273
    %s2378 = sadd.s32 0, 48
    %s2379 = scalar_lea.vmem [#allocation9], %s2378
    %2380 = vst [vmem:[%s2379 - $0x4] sm:$0xf0] %v2290
    %2381 = vst [vmem:[%s2379 + $0x4] sm:$0xff] %v2291
    %2382 = vst [vmem:[%s2379 + $0xc] sm:$0xf] %v2292
    %s2383 = sadd.s32 0, 64
    %s2384 = scalar_lea.vmem [#allocation9], %s2383
    %2385 = vst [vmem:[%s2384 - $0x1] sm:$0xfe] %v2309
    %2386 = vst [vmem:[%s2384 + $0x7] sm:$0xff] %v2310
    %2387 = vst [vmem:[%s2384 + $0xf] sm:$0x1] %v2311
    %s2388 = sadd.s32 0, 80
    %s2389 = scalar_lea.vmem [#allocation9], %s2388
    %2390 = vst [vmem:[%s2389 - $0x1] sm:$0xfe] %v2328
    %2391 = vst [vmem:[%s2389 + $0x7] sm:$0xff] %v2329
    %2392 = vst [vmem:[%s2389 + $0xf] sm:$0x1] %v2330
    %s2393 = sadd.s32 0, 96
    %s2394 = scalar_lea.vmem [#allocation9], %s2393
    %2395 = vst [vmem:[%s2394] sm:$0xff] %v2346
    %2396 = vst [vmem:[%s2394 + $0x8] sm:$0xff] %v2347
    %s2397 = sadd.s32 0, 112
    %s2398 = scalar_lea.vmem [#allocation9], %s2397
    %2399 = vst [vmem:[%s2398] sm:$0xff] %v2363
    %2400 = vst [vmem:[%s2398 + $0x8] sm:$0xff] %v2364
    // Predicated region
    $region26: #{tpu_custom_call.1} parent=1 // pred_check
      _
    $region27: #{tpu_custom_call.1} parent=1 // pred_check_branch
      %2402 = sbr.rel (0) target = $region29
    $region28: #{tpu_custom_call.1} parent=1 // pred_region
      %2404 = vsyncadd [#allocation4], 0
      %s2405 = sshll.u32 [#allocation9], 4
      %s2406 = int_to_ptr.vmem [resolvable:$true] %s2405
      %s2407 = sshll.u32 %s3, 4
      %s2408 = int_to_ptr.hbm [resolvable:$true] %s2407
      %2413 = dma.vmem_to_hbm [thread:$0]  %s2406, 2048, %s2408, [#allocation4], 128, 128, 8
    $region29: #{tpu_custom_call.1} parent=1 // pred_fallthru
      _
    // Predicated region
    $region30: #{tpu_custom_call.1} parent=1 // pred_check
      _
    $region31: #{tpu_custom_call.1} parent=1 // pred_check_branch
      %2415 = sbr.rel (0) target = $region33
    $region32: #{tpu_custom_call.1} parent=1 // pred_region
      %2417 = dma.done [#allocation4], 2048
    $region33: #{tpu_custom_call.1} parent=1 // pred_fallthru
      _
    %2418 = vsyncpa [#allocation3], 1
    %2419 = vsyncpa [#allocation4], 1
    %2420 = vsyncpa [#allocation5], 1
    %2421 = vsyncpa [#allocation6], 1

</llo_original>
